<compile_context>
chip_gen: v6e
topology: v6e:2x2x1
jax: 0.10.0
libtpu: 0.0.40
codegen_flags: <defaults>
</compile_context>

<pallas_src>
import math

import jax
import jax.numpy as jnp
from jax.experimental import pallas as pl
from jax.experimental.pallas import tpu as pltpu


def attn_critic_kernel(qk_ref, v_ref, a_ref, colid_ref, rowid_ref,
                       wp_s_ref, wp_a_ref, bp_ref,
                       w1_ref, b1_ref, w2t_ref, b2_ref,
                       out_ref):
    rows = v_ref.shape[0]

    q2d = qk_ref[0:rows, :]                  # [rows, Dk] bf16 (pre-scaled by 1/sqrt(dk))
    k2d = qk_ref[rows:2 * rows, :]           # [rows, Dk] bf16
    v2d = v_ref[...]                         # [rows, Dv] bf16
    a2d = a_ref[...]                         # [rows, Da] bf16

    # --- flattened masked scaled-dot-product attention ----------------------
    # One [rows,Dk] x [Dk,rows] MXU pass (instead of tb tiny batched passes).
    scores = jax.lax.dot_general(
        q2d, k2d, (((1,), (1,)), ((), ())),
        preferred_element_type=jnp.float32)                      # [rows, rows]

    # Block-diagonal (same-batch) + non-padded-key validity mask:
    # rowid[i] = batch of query row i; colid[j] = batch of key j, or -1 if
    # key j is padding → padded keys never match any row.
    valid = rowid_ref[...] == colid_ref[...]                     # [rows, rows]
    scores = jnp.where(valid, scores, jnp.float32(-1e9))
    # TODO(synk): a fully-masked row (every vertex of a batch padded) falls
    # back to a uniform softmax over all 128 tile columns rather than just its
    # own batch; the demo never hits this edge case.

    # row softmax in f32 (exact reciprocal — approx rcp flagged in review)
    s_max = jnp.max(scores, axis=-1, keepdims=True)
    p = jnp.exp(scores - s_max)
    p = p * pl.reciprocal(jnp.sum(p, axis=-1, keepdims=True))

    # state = P @ V : one [rows,rows] x [rows,Dv] MXU pass
    state = jnp.dot(p.astype(v2d.dtype), v2d,
                    preferred_element_type=jnp.float32)          # [rows, Dv]

    # --- proj(cat([state, action], -1)) = state @ Wp_s + action @ Wp_a + bp --
    x = (jnp.dot(state.astype(jnp.bfloat16), wp_s_ref[...],
                 preferred_element_type=jnp.float32)
         + jnp.dot(a2d, wp_a_ref[...], preferred_element_type=jnp.float32)
         + bp_ref[...])                                           # [rows, E]

    # --- q_net: Linear -> ReLU -> Linear -------------------------------------
    h = jnp.dot(x.astype(jnp.bfloat16), w1_ref[...],
                preferred_element_type=jnp.float32) + b1_ref[...]
    h = jnp.maximum(h, 0.0)                                       # [rows, H]

    # final head as [1,H] @ [rows,H]^T -> lane-dense [1, rows] output row
    q_row = jax.lax.dot_general(
        w2t_ref[...], h.astype(jnp.bfloat16),
        (((1,), (1,)), ((), ())),
        preferred_element_type=jnp.float32) + b2_ref[...]         # [1, rows]

    out_ref[...] = q_row


def _pick_tb(B, N, max_rows=256):
    """Largest divisor tb of B with rows = tb*N <= max_rows, preferring
    rows % 128 == 0 (lane-dense output) and >= 2 grid steps (v7x megacore)."""
    cands = [t for t in range(1, B + 1) if B % t == 0 and t * N <= max_rows]
    if not cands:
        return 1
    lane_ok = [t for t in cands if (t * N) % 128 == 0]
    pool = lane_ok if lane_ok else cands
    multi = [t for t in pool if B // t >= 2]
    pool = multi if multi else pool
    return max(pool)


def attention_critic_forward(joint_q, vertex_k, vertex_v, vertex_mask, action,
                             params, *, tb=None):
    """joint_q [B,N,Dq], vertex_k [B,N,Dk], vertex_v [B,N,Dv],
       vertex_mask [B,N] (bool, True = padding), action [B,N,Da]."""
    B, N, Dq = joint_q.shape
    Dk = vertex_k.shape[-1]
    Dv = vertex_v.shape[-1]
    Da = action.shape[-1]
    assert Dq == Dk, "dot-product attention requires Dq == Dk"

    if tb is None:
        tb = _pick_tb(B, N)
    assert B % tb == 0, "tb must divide B"
    G = B // tb
    rows = tb * N

    bf16, f32 = jnp.bfloat16, jnp.float32
    scale = 1.0 / math.sqrt(float(Dk))

    # Pre-flatten; fold the 1/sqrt(dk) scale into q; stack q & k along rows so
    # they arrive as one DMA per step with sublane-aligned static slices.
    q2d = (joint_q.astype(f32) * scale).astype(bf16).reshape(G, rows, Dq)
    k2d = vertex_k.astype(bf16).reshape(G, rows, Dk)
    qk = jnp.concatenate([q2d, k2d], axis=1)                  # [G, 2*rows, Dk]
    v2d = vertex_v.astype(bf16).reshape(G, rows, Dv)          # [G, rows, Dv]
    a2d = action.astype(bf16).reshape(G, rows, Da)            # [G, rows, Da]

    # Row/col batch-id vectors: block-diagonal + key-padding mask in one compare.
    local_b = (jnp.arange(rows, dtype=jnp.int32) // N).astype(f32)   # [rows]
    row_ids = local_b.reshape(rows, 1)                                # [rows, 1]
    col_ids = jnp.where(vertex_mask.reshape(G, rows),
                        jnp.float32(-1.0),
                        jnp.broadcast_to(local_b, (G, rows)))
    col_ids = col_ids.reshape(G, 1, rows)                             # [G, 1, rows]

    wp_s = params["wp_s"].astype(bf16)                        # [Dv, E]
    wp_a = params["wp_a"].astype(bf16)                        # [Da, E]
    bp = params["bp"].astype(f32)                             # [1, E]
    w1 = params["w1"].astype(bf16)                            # [E, H]
    b1 = params["b1"].astype(f32)                             # [1, H]
    w2t = params["w2"].astype(bf16).reshape(1, -1)            # [1, H]
    b2 = params["b2"].astype(f32)                             # [1, 1]

    def step_spec(shape):   # [G, r, c] -> per-step block [r, c]
        return pl.BlockSpec((None,) + tuple(shape[1:]), lambda g: (g, 0, 0))

    def whole(arr):         # resident weight/bias (constant index map)
        return pl.BlockSpec(arr.shape, lambda g: (0,) * arr.ndim)

    out = pl.pallas_call(
        attn_critic_kernel,
        out_shape=jax.ShapeDtypeStruct((G, 1, rows), jnp.float32),
        grid_spec=pltpu.PrefetchScalarGridSpec(
            num_scalar_prefetch=0,
            grid=(G,),
            in_specs=[
                step_spec(qk.shape),                          # stacked q|k
                step_spec(v2d.shape),                         # v
                step_spec(a2d.shape),                         # action
                step_spec(col_ids.shape),                     # key batch ids / pad
                whole(row_ids),                               # query batch ids
                whole(wp_s), whole(wp_a), whole(bp),          # proj
                whole(w1), whole(b1), whole(w2t), whole(b2),  # q_net
            ],
            out_specs=pl.BlockSpec((None, 1, rows), lambda g: (g, 0, 0)),
        ),
        compiler_params=pltpu.CompilerParams(
            dimension_semantics=("parallel",),
            vmem_limit_bytes=32 * 1024 * 1024),
    )(qk, v2d, a2d, col_ids, row_ids, wp_s, wp_a, bp, w1, b1, w2t, b2)

    return out.reshape(B, N, 1)


def reference_forward(joint_q, vertex_k, vertex_v, vertex_mask, action, params):
    """Pure-JAX f32 reference of the same semantics."""
    Dk = vertex_k.shape[-1]
    scores = jnp.einsum("bnd,bmd->bnm", joint_q, vertex_k) / math.sqrt(float(Dk))
    scores = jnp.where(vertex_mask[:, None, :], -1e9, scores)
    p = jax.nn.softmax(scores, axis=-1)
    state = jnp.einsum("bnm,bmd->bnd", p, vertex_v)
    x = jnp.concatenate([state, action], axis=-1)
    wp = jnp.concatenate([params["wp_s"], params["wp_a"]], axis=0)
    x = x @ wp + params["bp"][0]
    h = jnp.maximum(x @ params["w1"] + params["b1"][0], 0.0)
    return h @ params["w2"] + params["b2"][0]


def _bf16_round(x):
    return x.astype(jnp.bfloat16).astype(jnp.float32)


if __name__ == "__main__":
    # Small but MXU-friendly shapes: rows per grid step = 128, 2 parallel steps.
    B, N = 32, 8             # batch, joints/vertices
    Dq = Dk = 32             # query/key feature dim
    Dv = 32                  # value feature dim (-> state_features dim)
    Da = 8                   # per-joint action dim
    E = 32                   # joint_embed_dim
    H = 64                   # q_net hidden_dim

    key = jax.random.PRNGKey(0)
    ks = jax.random.split(key, 8)

    joint_q = jax.random.normal(ks[0], (B, N, Dq), jnp.float32)
    vertex_k = jax.random.normal(ks[1], (B, N, Dk), jnp.float32)
    vertex_v = jax.random.normal(ks[2], (B, N, Dv), jnp.float32)
    action = jax.random.normal(ks[3], (B, N, Da), jnp.float32)
    # mask: a couple of batches have padded trailing vertices
    vertex_mask = (jnp.zeros((B, N), dtype=bool)
                   .at[1, -2:].set(True)
                   .at[5, -3:].set(True))

    def init_linear(k, fan_in, fan_out):
        bound = 1.0 / math.sqrt(fan_in)
        kw, kb = jax.random.split(k)
        w = jax.random.uniform(kw, (fan_in, fan_out), jnp.float32, -bound, bound)
        b = jax.random.uniform(kb, (1, fan_out), jnp.float32, -bound, bound)
        return w, b

    # proj: Linear(Dv + Da, E) — stored split so the kernel avoids a concat
    wp_full, bp = init_linear(ks[4], Dv + Da, E)
    params = {
        "wp_s": wp_full[:Dv],        # [Dv, E]
        "wp_a": wp_full[Dv:],        # [Da, E]
        "bp": bp,                    # [1, E]
    }
    params["w1"], params["b1"] = init_linear(ks[5], E, H)   # q_net Linear(E, H)
    params["w2"], params["b2"] = init_linear(ks[6], H, 1)   # q_net Linear(H, 1)

    q_value = attention_critic_forward(joint_q, vertex_k, vertex_v,
                                       vertex_mask, action, params)
    q_value = jax.block_until_ready(q_value)

    # Reference on bf16-rounded inputs/weights (kernel runs matmuls in bf16
    # with f32 accumulation; biases stay f32).
    ref_params = {
        "wp_s": _bf16_round(params["wp_s"]),
        "wp_a": _bf16_round(params["wp_a"]),
        "bp": params["bp"],
        "w1": _bf16_round(params["w1"]),
        "b1": params["b1"],
        "w2": _bf16_round(params["w2"]),
        "b2": params["b2"],
    }
    ref = reference_forward(_bf16_round(joint_q), _bf16_round(vertex_k),
                            _bf16_round(vertex_v), vertex_mask,
                            _bf16_round(action), ref_params)

    assert q_value.shape == (B, N, 1)
    assert jnp.allclose(q_value, ref, atol=5e-2, rtol=5e-2), (
        "mismatch vs reference: max abs diff = "
        f"{float(jnp.max(jnp.abs(q_value - ref)))}")

    print("KERNEL_OK")
</pallas_src>

<mosaic_0001>
module attributes {stable_mosaic.version = 11 : i64} {
  func.func @attn_critic_kernel(%arg0: i32, %arg1: memref<1x256x32xbf16, #tpu.memory_space<vmem>>, %arg2: memref<1x128x32xbf16, #tpu.memory_space<vmem>>, %arg3: memref<1x128x8xbf16, #tpu.memory_space<vmem>>, %arg4: memref<1x1x128xf32, #tpu.memory_space<vmem>>, %arg5: memref<128x1xf32, #tpu.memory_space<vmem>>, %arg6: memref<32x32xbf16, #tpu.memory_space<vmem>>, %arg7: memref<8x32xbf16, #tpu.memory_space<vmem>>, %arg8: memref<1x32xf32, #tpu.memory_space<vmem>>, %arg9: memref<32x64xbf16, #tpu.memory_space<vmem>>, %arg10: memref<1x64xf32, #tpu.memory_space<vmem>>, %arg11: memref<1x64xbf16, #tpu.memory_space<vmem>>, %arg12: memref<1x1xf32, #tpu.memory_space<vmem>>, %arg13: memref<1x1x128xf32, #tpu.memory_space<vmem>>) attributes {dimension_semantics = [#tpu.dimension_semantics<parallel>], iteration_bounds = array<i64: 2>, scalar_prefetch = 0 : i64, scratch_operands = 0 : i64, tpu.core_type = #tpu.core_type<tc>, window_params = [{transform_indices = @transform_0, window_bounds = array<i64: 1, 256, 32>}, {transform_indices = @transform_1, window_bounds = array<i64: 1, 128, 32>}, {transform_indices = @transform_2, window_bounds = array<i64: 1, 128, 8>}, {transform_indices = @transform_3, window_bounds = array<i64: 1, 1, 128>}, {pipeline_mode = #tpu.pipeline_mode<synchronous>, transform_indices = @transform_4, window_bounds = array<i64: 128, 1>}, {pipeline_mode = #tpu.pipeline_mode<synchronous>, transform_indices = @transform_5, window_bounds = array<i64: 32, 32>}, {pipeline_mode = #tpu.pipeline_mode<synchronous>, transform_indices = @transform_6, window_bounds = array<i64: 8, 32>}, {pipeline_mode = #tpu.pipeline_mode<synchronous>, transform_indices = @transform_7, window_bounds = array<i64: 1, 32>}, {pipeline_mode = #tpu.pipeline_mode<synchronous>, transform_indices = @transform_8, window_bounds = array<i64: 32, 64>}, {pipeline_mode = #tpu.pipeline_mode<synchronous>, transform_indices = @transform_9, window_bounds = array<i64: 1, 64>}, {pipeline_mode = #tpu.pipeline_mode<synchronous>, transform_indices = @transform_10, window_bounds = array<i64: 1, 64>}, {pipeline_mode = #tpu.pipeline_mode<synchronous>, transform_indices = @transform_11, window_bounds = array<i64: 1, 1>}, {transform_indices = @transform_12, window_bounds = array<i64: 1, 1, 128>}]} {
    %c0 = arith.constant 0 : index
    %c0_0 = arith.constant 0 : index
    %c0_1 = arith.constant 0 : index
    %0 = vector.load %arg1[%c0, %c0_0, %c0_1] : memref<1x256x32xbf16, #tpu.memory_space<vmem>>, vector<1x128x32xbf16>
    %1 = vector.shape_cast %0 : vector<1x128x32xbf16> to vector<128x32xbf16>
    %c0_2 = arith.constant 0 : index
    %c128 = arith.constant 128 : index
    %c0_3 = arith.constant 0 : index
    %2 = vector.load %arg1[%c0_2, %c128, %c0_3] : memref<1x256x32xbf16, #tpu.memory_space<vmem>>, vector<1x128x32xbf16>
    %3 = vector.shape_cast %2 : vector<1x128x32xbf16> to vector<128x32xbf16>
    %c0_4 = arith.constant 0 : index
    %c0_5 = arith.constant 0 : index
    %c0_6 = arith.constant 0 : index
    %4 = vector.load %arg2[%c0_4, %c0_5, %c0_6] : memref<1x128x32xbf16, #tpu.memory_space<vmem>>, vector<1x128x32xbf16>
    %5 = vector.shape_cast %4 : vector<1x128x32xbf16> to vector<128x32xbf16>
    %c0_7 = arith.constant 0 : index
    %c0_8 = arith.constant 0 : index
    %c0_9 = arith.constant 0 : index
    %6 = vector.load %arg3[%c0_7, %c0_8, %c0_9] : memref<1x128x8xbf16, #tpu.memory_space<vmem>>, vector<1x128x8xbf16>
    %7 = vector.shape_cast %6 : vector<1x128x8xbf16> to vector<128x8xbf16>
    %cst = arith.constant dense<0.000000e+00> : vector<128x128xf32>
    %8 = tpu.matmul %1, %3, %cst {dimension_numbers = #tpu.dot_dimension_numbers<[1], [1], [0], [0], [0, 0, 1, 0], [], []>} : vector<128x32xbf16>, vector<128x32xbf16>, vector<128x128xf32> -> vector<128x128xf32>
    %c0_10 = arith.constant 0 : index
    %c0_11 = arith.constant 0 : index
    %9 = vector.load %arg5[%c0_10, %c0_11] : memref<128x1xf32, #tpu.memory_space<vmem>>, vector<128x1xf32>
    %c0_12 = arith.constant 0 : index
    %c0_13 = arith.constant 0 : index
    %c0_14 = arith.constant 0 : index
    %10 = vector.load %arg4[%c0_12, %c0_13, %c0_14] : memref<1x1x128xf32, #tpu.memory_space<vmem>>, vector<1x1x128xf32>
    %11 = vector.shape_cast %10 : vector<1x1x128xf32> to vector<1x128xf32>
    %12 = vector.broadcast %9 : vector<128x1xf32> to vector<128x128xf32>
    %13 = vector.broadcast %11 : vector<1x128xf32> to vector<128x128xf32>
    %14 = arith.cmpf oeq, %12, %13 : vector<128x128xf32>
    %cst_15 = arith.constant -1.000000e+09 : f32
    %15 = vector.broadcast %cst_15 : f32 to vector<128x128xf32>
    %16 = arith.select %14, %8, %15 : vector<128x128xi1>, vector<128x128xf32>
    %cst_16 = arith.constant dense<0xFF800000> : vector<128xf32>
    %17 = vector.multi_reduction <maximumf>, %16, %cst_16 [1] : vector<128x128xf32> to vector<128xf32>
    %18 = vector.shape_cast %17 : vector<128xf32> to vector<128x1xf32>
    %19 = vector.broadcast %18 : vector<128x1xf32> to vector<128x128xf32>
    %20 = arith.subf %16, %19 : vector<128x128xf32>
    %21 = math.exp %20 : vector<128x128xf32>
    %cst_17 = arith.constant dense<0.000000e+00> : vector<128xf32>
    %22 = vector.multi_reduction <add>, %21, %cst_17 [1] : vector<128x128xf32> to vector<128xf32>
    %23 = vector.shape_cast %22 : vector<128xf32> to vector<128x1xf32>
    %24 = tpu.reciprocal %23 : vector<128x1xf32> -> vector<128x1xf32>
    %25 = vector.broadcast %24 : vector<128x1xf32> to vector<128x128xf32>
    %26 = arith.mulf %21, %25 : vector<128x128xf32>
    %27 = arith.truncf %26 : vector<128x128xf32> to vector<128x128xbf16>
    %cst_18 = arith.constant dense<0.000000e+00> : vector<128x32xf32>
    %28 = tpu.matmul %27, %5, %cst_18 {dimension_numbers = #tpu.dot_dimension_numbers<[1], [0], [0], [1], [0, 0, 1, 1], [], []>} : vector<128x128xbf16>, vector<128x32xbf16>, vector<128x32xf32> -> vector<128x32xf32>
    %29 = arith.truncf %28 : vector<128x32xf32> to vector<128x32xbf16>
    %c0_19 = arith.constant 0 : index
    %c0_20 = arith.constant 0 : index
    %30 = vector.load %arg6[%c0_19, %c0_20] : memref<32x32xbf16, #tpu.memory_space<vmem>>, vector<32x32xbf16>
    %cst_21 = arith.constant dense<0.000000e+00> : vector<128x32xf32>
    %31 = tpu.matmul %29, %30, %cst_21 {dimension_numbers = #tpu.dot_dimension_numbers<[1], [0], [0], [1], [0, 0, 1, 1], [], []>} : vector<128x32xbf16>, vector<32x32xbf16>, vector<128x32xf32> -> vector<128x32xf32>
    %c0_22 = arith.constant 0 : index
    %c0_23 = arith.constant 0 : index
    %32 = vector.load %arg7[%c0_22, %c0_23] : memref<8x32xbf16, #tpu.memory_space<vmem>>, vector<8x32xbf16>
    %cst_24 = arith.constant dense<0.000000e+00> : vector<128x32xf32>
    %33 = tpu.matmul %7, %32, %cst_24 {dimension_numbers = #tpu.dot_dimension_numbers<[1], [0], [0], [1], [0, 0, 1, 1], [], []>} : vector<128x8xbf16>, vector<8x32xbf16>, vector<128x32xf32> -> vector<128x32xf32>
    %34 = arith.addf %31, %33 : vector<128x32xf32>
    %c0_25 = arith.constant 0 : index
    %c0_26 = arith.constant 0 : index
    %35 = vector.load %arg8[%c0_25, %c0_26] : memref<1x32xf32, #tpu.memory_space<vmem>>, vector<1x32xf32>
    %36 = vector.broadcast %35 : vector<1x32xf32> to vector<128x32xf32>
    %37 = arith.addf %34, %36 : vector<128x32xf32>
    %38 = arith.truncf %37 : vector<128x32xf32> to vector<128x32xbf16>
    %c0_27 = arith.constant 0 : index
    %c0_28 = arith.constant 0 : index
    %39 = vector.load %arg9[%c0_27, %c0_28] : memref<32x64xbf16, #tpu.memory_space<vmem>>, vector<32x64xbf16>
    %cst_29 = arith.constant dense<0.000000e+00> : vector<128x64xf32>
    %40 = tpu.matmul %38, %39, %cst_29 {dimension_numbers = #tpu.dot_dimension_numbers<[1], [0], [0], [1], [0, 0, 1, 1], [], []>} : vector<128x32xbf16>, vector<32x64xbf16>, vector<128x64xf32> -> vector<128x64xf32>
    %c0_30 = arith.constant 0 : index
    %c0_31 = arith.constant 0 : index
    %41 = vector.load %arg10[%c0_30, %c0_31] : memref<1x64xf32, #tpu.memory_space<vmem>>, vector<1x64xf32>
    %42 = vector.broadcast %41 : vector<1x64xf32> to vector<128x64xf32>
    %43 = arith.addf %40, %42 : vector<128x64xf32>
    %cst_32 = arith.constant 0.000000e+00 : f32
    %44 = vector.broadcast %cst_32 : f32 to vector<128x64xf32>
    %45 = arith.maximumf %43, %44 : vector<128x64xf32>
    %c0_33 = arith.constant 0 : index
    %c0_34 = arith.constant 0 : index
    %46 = vector.load %arg11[%c0_33, %c0_34] : memref<1x64xbf16, #tpu.memory_space<vmem>>, vector<1x64xbf16>
    %47 = arith.truncf %45 : vector<128x64xf32> to vector<128x64xbf16>
    %cst_35 = arith.constant dense<0.000000e+00> : vector<1x128xf32>
    %48 = tpu.matmul %46, %47, %cst_35 {dimension_numbers = #tpu.dot_dimension_numbers<[1], [1], [0], [0], [0, 0, 1, 0], [], []>} : vector<1x64xbf16>, vector<128x64xbf16>, vector<1x128xf32> -> vector<1x128xf32>
    %c0_36 = arith.constant 0 : index
    %c0_37 = arith.constant 0 : index
    %49 = vector.load %arg12[%c0_36, %c0_37] : memref<1x1xf32, #tpu.memory_space<vmem>>, vector<1x1xf32>
    %50 = vector.broadcast %49 : vector<1x1xf32> to vector<1x128xf32>
    %51 = arith.addf %48, %50 : vector<1x128xf32>
    %c0_38 = arith.constant 0 : index
    %c0_39 = arith.constant 0 : index
    %c0_40 = arith.constant 0 : index
    %52 = vector.load %arg13[%c0_38, %c0_39, %c0_40] : memref<1x1x128xf32, #tpu.memory_space<vmem>>, vector<1x1x128xf32>
    %53 = vector.shape_cast %52 : vector<1x1x128xf32> to vector<1x128xf32>
    %54 = vector.shape_cast %51 : vector<1x128xf32> to vector<1x1x128xf32>
    tpu.vector_store %arg13[%c0_38, %c0_39, %c0_40], %54 {strides = array<i32>} : memref<1x1x128xf32, #tpu.memory_space<vmem>>, vector<1x1x128xf32>,
    return
  }
  func.func @transform_0(%arg0: i32) -> (i32, i32, i32) {
    %c0_i32 = arith.constant 0 : i32
    %c0_i32_0 = arith.constant 0 : i32
    %c0_i32_1 = arith.constant 0 : i32
    return %arg0, %c0_i32, %c0_i32_0 : i32, i32, i32
  }
  func.func @transform_1(%arg0: i32) -> (i32, i32, i32) {
    %c0_i32 = arith.constant 0 : i32
    %c0_i32_0 = arith.constant 0 : i32
    %c0_i32_1 = arith.constant 0 : i32
    return %arg0, %c0_i32, %c0_i32_0 : i32, i32, i32
  }
  func.func @transform_2(%arg0: i32) -> (i32, i32, i32) {
    %c0_i32 = arith.constant 0 : i32
    %c0_i32_0 = arith.constant 0 : i32
    %c0_i32_1 = arith.constant 0 : i32
    return %arg0, %c0_i32, %c0_i32_0 : i32, i32, i32
  }
  func.func @transform_3(%arg0: i32) -> (i32, i32, i32) {
    %c0_i32 = arith.constant 0 : i32
    %c0_i32_0 = arith.constant 0 : i32
    %c0_i32_1 = arith.constant 0 : i32
    return %arg0, %c0_i32, %c0_i32_0 : i32, i32, i32
  }
  func.func @transform_4(%arg0: i32) -> (i32, i32) {
    %c0_i32 = arith.constant 0 : i32
    %c0_i32_0 = arith.constant 0 : i32
    %c0_i32_1 = arith.constant 0 : i32
    return %c0_i32, %c0_i32_0 : i32, i32
  }
  func.func @transform_5(%arg0: i32) -> (i32, i32) {
    %c0_i32 = arith.constant 0 : i32
    %c0_i32_0 = arith.constant 0 : i32
    %c0_i32_1 = arith.constant 0 : i32
    return %c0_i32, %c0_i32_0 : i32, i32
  }
  func.func @transform_6(%arg0: i32) -> (i32, i32) {
    %c0_i32 = arith.constant 0 : i32
    %c0_i32_0 = arith.constant 0 : i32
    %c0_i32_1 = arith.constant 0 : i32
    return %c0_i32, %c0_i32_0 : i32, i32
  }
  func.func @transform_7(%arg0: i32) -> (i32, i32) {
    %c0_i32 = arith.constant 0 : i32
    %c0_i32_0 = arith.constant 0 : i32
    %c0_i32_1 = arith.constant 0 : i32
    return %c0_i32, %c0_i32_0 : i32, i32
  }
  func.func @transform_8(%arg0: i32) -> (i32, i32) {
    %c0_i32 = arith.constant 0 : i32
    %c0_i32_0 = arith.constant 0 : i32
    %c0_i32_1 = arith.constant 0 : i32
    return %c0_i32, %c0_i32_0 : i32, i32
  }
  func.func @transform_9(%arg0: i32) -> (i32, i32) {
    %c0_i32 = arith.constant 0 : i32
    %c0_i32_0 = arith.constant 0 : i32
    %c0_i32_1 = arith.constant 0 : i32
    return %c0_i32, %c0_i32_0 : i32, i32
  }
  func.func @transform_10(%arg0: i32) -> (i32, i32) {
    %c0_i32 = arith.constant 0 : i32
    %c0_i32_0 = arith.constant 0 : i32
    %c0_i32_1 = arith.constant 0 : i32
    return %c0_i32, %c0_i32_0 : i32, i32
  }
  func.func @transform_11(%arg0: i32) -> (i32, i32) {
    %c0_i32 = arith.constant 0 : i32
    %c0_i32_0 = arith.constant 0 : i32
    %c0_i32_1 = arith.constant 0 : i32
    return %c0_i32, %c0_i32_0 : i32, i32
  }
  func.func @transform_12(%arg0: i32) -> (i32, i32, i32) {
    %c0_i32 = arith.constant 0 : i32
    %c0_i32_0 = arith.constant 0 : i32
    %c0_i32_1 = arith.constant 0 : i32
    return %arg0, %c0_i32, %c0_i32_0 : i32, i32, i32
  }
}

</mosaic_0001>

<llo_original>
// kernel: tpu_custom_call.1
$region0: #{tpu_custom_call.1}
  #allocation0 [shape = 'u32[]', space=smem, size = 0x4, offset = 0x4, fixed_abs, tag = 'smem constant byte address 0x4 - core index']
  #allocation1 [shape = 'u32[144,128]{1,0:T(1,128)}', space=vmem, size = 0x12000, scoped, tag = 'internal scratch']
  #allocation2 [shape = 'f32[1,1]{1,0:T(1,128)S(1)}', space=vmem, size = 0x200, scoped, tag = 'scoped memory for tpu_custom_call.1']
  %s0 = inlined_call_operand.vmem [shape: bf16[2,256,32], index: 0, kind: input, shape index: {}]
  %s1 = inlined_call_operand.vmem [shape: bf16[2,128,32], index: 1, kind: input, shape index: {}]
  %s2 = inlined_call_operand.vmem [shape: bf16[2,128,8], index: 2, kind: input, shape index: {}]
  %s3 = inlined_call_operand.vmem [shape: f32[2,1,128], index: 3, kind: input, shape index: {}]
  %s4 = inlined_call_operand.vmem [shape: f32[128,1], index: 4, kind: input, shape index: {}]
  %s5 = inlined_call_operand.vmem [shape: bf16[32,32], index: 5, kind: input, shape index: {}]
  %s6 = inlined_call_operand.vmem [shape: bf16[8,32], index: 6, kind: input, shape index: {}]
  %s7 = inlined_call_operand.vmem [shape: f32[1,32], index: 7, kind: input, shape index: {}]
  %s8 = inlined_call_operand.vmem [shape: bf16[32,64], index: 8, kind: input, shape index: {}]
  %s9 = inlined_call_operand.vmem [shape: f32[1,64], index: 9, kind: input, shape index: {}]
  %s10 = inlined_call_operand.vmem [shape: bf16[1,64], index: 10, kind: input, shape index: {}]
  %s11 = inlined_call_operand.<no memory space> [shape: f32[1,1], index: 11, kind: input, shape index: {}]
  %s12 = inlined_call_operand.hbm [shape: f32[2,1,128], index: 12, kind: output, shape index: {}]
  %s13 = sld [smem:[#allocation0]]
  $region81: #{tpu_custom_call.1} parent=0
    _
  %s15 = ssub.s32 1, %s13
  %s16 = scalar_select 0, %s15, %s13
  %v17 = vstv %s11
  %18 = vst [vmem:[#allocation2] sm:$0x1] %v17
  $region1: #{tpu_custom_call.1} parent=0
    #allocation3 [shape = 'u8[1024]{0}', space=vmem, size = 0x400, scoped, tag = 'output window, operand 0']
    #allocation4 [shape = 's32[2]{0}', space=sflag, size = 0x8, scoped, tag = 'scoped memory for tpu_custom_call.1']
    %19 = vsyncpa [#allocation4], 0
    %s20 = scalar_lea.sflag [#allocation4], 1
    %21 = vsyncpa %s20, 0
    loop: start=0, step=1, limit=4
    $region2: #{tpu_custom_call.1} parent=1 // loop_pre_header
      _
    $region3: #{tpu_custom_call.1} parent=1 // loop_header
      %s23 = sphi 0, %s27
      %p24 = scmp.ge.s32.totalorder %s23, 4
      %s33 = sphi 0, %s35
      %s36 = sphi 0, %s33
      %s37 = sphi 0, %s36
      %s53 = sphi 0, %s37
      %s59 = sphi 0, %s61
      %s62 = sphi 0, %s59
      %s63 = sphi 0, %s62
      %s79 = sphi 0, %s63
      %s85 = sphi 0, %s87
      %s88 = sphi 0, %s85
      %s89 = sphi 0, %s88
      %s105 = sphi 0, %s89
      %s111 = sphi 0, %s113
      %s114 = sphi 0, %s111
      %s115 = sphi 0, %s114
      %s131 = sphi 0, %s115
      %s135 = sphi 0, %s135
      %s137 = sphi 0, %s135
      %s138 = sphi 0, %s137
      %s152 = sphi 0, %s138
      %s156 = sphi 0, %s156
      %s158 = sphi 0, %s156
      %s159 = sphi 0, %s158
      %s173 = sphi 0, %s159
      %s177 = sphi 0, %s177
      %s179 = sphi 0, %s177
      %s180 = sphi 0, %s179
      %s194 = sphi 0, %s180
      %s198 = sphi 0, %s198
      %s200 = sphi 0, %s198
      %s201 = sphi 0, %s200
      %s215 = sphi 0, %s201
      %s219 = sphi 0, %s219
      %s221 = sphi 0, %s219
      %s222 = sphi 0, %s221
      %s236 = sphi 0, %s222
      %s240 = sphi 0, %s240
      %s242 = sphi 0, %s240
      %s243 = sphi 0, %s242
      %s257 = sphi 0, %s243
      %s261 = sphi 0, %s261
      %s263 = sphi 0, %s261
      %s264 = sphi 0, %s263
      %s278 = sphi 0, %s264
      %s282 = sphi 0, %s282
      %s284 = sphi 0, %s282
      %s285 = sphi 0, %s284
      %s299 = sphi 0, %s285
      %s305 = sphi 0, %s307
      %s308 = sphi 0, %s305
      %s309 = sphi 0, %s308
      %s325 = sphi 0, %s309
    $region4: #{tpu_custom_call.1} parent=1 // loop_header_branch
      %26 = sbr.rel (%p24) target = $region8
    $region5: #{tpu_custom_call.1} parent=1 // loop_body
      %s28 = ssub.s32 %s23, 1
      %s29 = ssub.s32 %s23, 2
      %s30 = sadd.s32 %s23, 1
      %s31 = ssub.s32 %s23, %s30
      %p32 = scmp.eq.s32.totalorder %s31, 0
      %s34 = sadd.s32 %s33, 1
      %s35 = scalar_select %p32, %s33, %s34
      %p38 = pneg %p32
      %p39 = scmp.eq.s32.totalorder %s23, 1
      %p40 = por %p38, %p39
      %p41 = scmp.ne.s32.totalorder %s33, %s36
      %p42 = scmp.eq.s32.totalorder %s23, 0
      %p43 = por %p41, %p42
      %p44 = scmp.ne.s32.totalorder %s33, %s36
      %p45 = scmp.eq.s32.totalorder %s28, 1
      %p46 = por %p44, %p45
      %p47 = scmp.ne.s32.totalorder %s36, %s37
      %p48 = scmp.eq.s32.totalorder %s28, 0
      %p49 = por %p47, %p48
      %p50 = scmp.ne.s32.totalorder %s36, %s37
      %p51 = scmp.eq.s32.totalorder %s29, 1
      %p52 = por %p50, %p51
      %p54 = scmp.ne.s32.totalorder %s37, %s53
      %p55 = scmp.eq.s32.totalorder %s29, 0
      %p56 = por %p54, %p55
      %s57 = ssub.s32 %s23, %s30
      %p58 = scmp.eq.s32.totalorder %s57, 0
      %s60 = sadd.s32 %s59, 1
      %s61 = scalar_select %p58, %s59, %s60
      %p64 = pneg %p58
      %p65 = scmp.eq.s32.totalorder %s23, 1
      %p66 = por %p64, %p65
      %p67 = scmp.ne.s32.totalorder %s59, %s62
      %p68 = scmp.eq.s32.totalorder %s23, 0
      %p69 = por %p67, %p68
      %p70 = scmp.ne.s32.totalorder %s59, %s62
      %p71 = scmp.eq.s32.totalorder %s28, 1
      %p72 = por %p70, %p71
      %p73 = scmp.ne.s32.totalorder %s62, %s63
      %p74 = scmp.eq.s32.totalorder %s28, 0
      %p75 = por %p73, %p74
      %p76 = scmp.ne.s32.totalorder %s62, %s63
      %p77 = scmp.eq.s32.totalorder %s29, 1
      %p78 = por %p76, %p77
      %p80 = scmp.ne.s32.totalorder %s63, %s79
      %p81 = scmp.eq.s32.totalorder %s29, 0
      %p82 = por %p80, %p81
      %s83 = ssub.s32 %s23, %s30
      %p84 = scmp.eq.s32.totalorder %s83, 0
      %s86 = sadd.s32 %s85, 1
      %s87 = scalar_select %p84, %s85, %s86
      %p90 = pneg %p84
      %p91 = scmp.eq.s32.totalorder %s23, 1
      %p92 = por %p90, %p91
      %p93 = scmp.ne.s32.totalorder %s85, %s88
      %p94 = scmp.eq.s32.totalorder %s23, 0
      %p95 = por %p93, %p94
      %p96 = scmp.ne.s32.totalorder %s85, %s88
      %p97 = scmp.eq.s32.totalorder %s28, 1
      %p98 = por %p96, %p97
      %p99 = scmp.ne.s32.totalorder %s88, %s89
      %p100 = scmp.eq.s32.totalorder %s28, 0
      %p101 = por %p99, %p100
      %p102 = scmp.ne.s32.totalorder %s88, %s89
      %p103 = scmp.eq.s32.totalorder %s29, 1
      %p104 = por %p102, %p103
      %p106 = scmp.ne.s32.totalorder %s89, %s105
      %p107 = scmp.eq.s32.totalorder %s29, 0
      %p108 = por %p106, %p107
      %s109 = ssub.s32 %s23, %s30
      %p110 = scmp.eq.s32.totalorder %s109, 0
      %s112 = sadd.s32 %s111, 1
      %s113 = scalar_select %p110, %s111, %s112
      %p116 = pneg %p110
      %p117 = scmp.eq.s32.totalorder %s23, 1
      %p118 = por %p116, %p117
      %p119 = scmp.ne.s32.totalorder %s111, %s114
      %p120 = scmp.eq.s32.totalorder %s23, 0
      %p121 = por %p119, %p120
      %p122 = scmp.ne.s32.totalorder %s111, %s114
      %p123 = scmp.eq.s32.totalorder %s28, 1
      %p124 = por %p122, %p123
      %p125 = scmp.ne.s32.totalorder %s114, %s115
      %p126 = scmp.eq.s32.totalorder %s28, 0
      %p127 = por %p125, %p126
      %p128 = scmp.ne.s32.totalorder %s114, %s115
      %p129 = scmp.eq.s32.totalorder %s29, 1
      %p130 = por %p128, %p129
      %p132 = scmp.ne.s32.totalorder %s115, %s131
      %p133 = scmp.eq.s32.totalorder %s29, 0
      %p134 = por %p132, %p133
      %s136 = sadd.s32 %s135, 1
      %p139 = scmp.eq.s32.totalorder %s23, 1
      %p140 = scmp.ne.s32.totalorder %s135, %s137
      %p141 = scmp.eq.s32.totalorder %s23, 0
      %p142 = por %p140, %p141
      %p143 = scmp.ne.s32.totalorder %s135, %s137
      %p144 = scmp.eq.s32.totalorder %s28, 1
      %p145 = por %p143, %p144
      %p146 = scmp.ne.s32.totalorder %s137, %s138
      %p147 = scmp.eq.s32.totalorder %s28, 0
      %p148 = por %p146, %p147
      %p149 = scmp.ne.s32.totalorder %s137, %s138
      %p150 = scmp.eq.s32.totalorder %s29, 1
      %p151 = por %p149, %p150
      %p153 = scmp.ne.s32.totalorder %s138, %s152
      %p154 = scmp.eq.s32.totalorder %s29, 0
      %p155 = por %p153, %p154
      %s157 = sadd.s32 %s156, 1
      %p160 = scmp.eq.s32.totalorder %s23, 1
      %p161 = scmp.ne.s32.totalorder %s156, %s158
      %p162 = scmp.eq.s32.totalorder %s23, 0
      %p163 = por %p161, %p162
      %p164 = scmp.ne.s32.totalorder %s156, %s158
      %p165 = scmp.eq.s32.totalorder %s28, 1
      %p166 = por %p164, %p165
      %p167 = scmp.ne.s32.totalorder %s158, %s159
      %p168 = scmp.eq.s32.totalorder %s28, 0
      %p169 = por %p167, %p168
      %p170 = scmp.ne.s32.totalorder %s158, %s159
      %p171 = scmp.eq.s32.totalorder %s29, 1
      %p172 = por %p170, %p171
      %p174 = scmp.ne.s32.totalorder %s159, %s173
      %p175 = scmp.eq.s32.totalorder %s29, 0
      %p176 = por %p174, %p175
      %s178 = sadd.s32 %s177, 1
      %p181 = scmp.eq.s32.totalorder %s23, 1
      %p182 = scmp.ne.s32.totalorder %s177, %s179
      %p183 = scmp.eq.s32.totalorder %s23, 0
      %p184 = por %p182, %p183
      %p185 = scmp.ne.s32.totalorder %s177, %s179
      %p186 = scmp.eq.s32.totalorder %s28, 1
      %p187 = por %p185, %p186
      %p188 = scmp.ne.s32.totalorder %s179, %s180
      %p189 = scmp.eq.s32.totalorder %s28, 0
      %p190 = por %p188, %p189
      %p191 = scmp.ne.s32.totalorder %s179, %s180
      %p192 = scmp.eq.s32.totalorder %s29, 1
      %p193 = por %p191, %p192
      %p195 = scmp.ne.s32.totalorder %s180, %s194
      %p196 = scmp.eq.s32.totalorder %s29, 0
      %p197 = por %p195, %p196
      %s199 = sadd.s32 %s198, 1
      %p202 = scmp.eq.s32.totalorder %s23, 1
      %p203 = scmp.ne.s32.totalorder %s198, %s200
      %p204 = scmp.eq.s32.totalorder %s23, 0
      %p205 = por %p203, %p204
      %p206 = scmp.ne.s32.totalorder %s198, %s200
      %p207 = scmp.eq.s32.totalorder %s28, 1
      %p208 = por %p206, %p207
      %p209 = scmp.ne.s32.totalorder %s200, %s201
      %p210 = scmp.eq.s32.totalorder %s28, 0
      %p211 = por %p209, %p210
      %p212 = scmp.ne.s32.totalorder %s200, %s201
      %p213 = scmp.eq.s32.totalorder %s29, 1
      %p214 = por %p212, %p213
      %p216 = scmp.ne.s32.totalorder %s201, %s215
      %p217 = scmp.eq.s32.totalorder %s29, 0
      %p218 = por %p216, %p217
      %s220 = sadd.s32 %s219, 1
      %p223 = scmp.eq.s32.totalorder %s23, 1
      %p224 = scmp.ne.s32.totalorder %s219, %s221
      %p225 = scmp.eq.s32.totalorder %s23, 0
      %p226 = por %p224, %p225
      %p227 = scmp.ne.s32.totalorder %s219, %s221
      %p228 = scmp.eq.s32.totalorder %s28, 1
      %p229 = por %p227, %p228
      %p230 = scmp.ne.s32.totalorder %s221, %s222
      %p231 = scmp.eq.s32.totalorder %s28, 0
      %p232 = por %p230, %p231
      %p233 = scmp.ne.s32.totalorder %s221, %s222
      %p234 = scmp.eq.s32.totalorder %s29, 1
      %p235 = por %p233, %p234
      %p237 = scmp.ne.s32.totalorder %s222, %s236
      %p238 = scmp.eq.s32.totalorder %s29, 0
      %p239 = por %p237, %p238
      %s241 = sadd.s32 %s240, 1
      %p244 = scmp.eq.s32.totalorder %s23, 1
      %p245 = scmp.ne.s32.totalorder %s240, %s242
      %p246 = scmp.eq.s32.totalorder %s23, 0
      %p247 = por %p245, %p246
      %p248 = scmp.ne.s32.totalorder %s240, %s242
      %p249 = scmp.eq.s32.totalorder %s28, 1
      %p250 = por %p248, %p249
      %p251 = scmp.ne.s32.totalorder %s242, %s243
      %p252 = scmp.eq.s32.totalorder %s28, 0
      %p253 = por %p251, %p252
      %p254 = scmp.ne.s32.totalorder %s242, %s243
      %p255 = scmp.eq.s32.totalorder %s29, 1
      %p256 = por %p254, %p255
      %p258 = scmp.ne.s32.totalorder %s243, %s257
      %p259 = scmp.eq.s32.totalorder %s29, 0
      %p260 = por %p258, %p259
      %s262 = sadd.s32 %s261, 1
      %p265 = scmp.eq.s32.totalorder %s23, 1
      %p266 = scmp.ne.s32.totalorder %s261, %s263
      %p267 = scmp.eq.s32.totalorder %s23, 0
      %p268 = por %p266, %p267
      %p269 = scmp.ne.s32.totalorder %s261, %s263
      %p270 = scmp.eq.s32.totalorder %s28, 1
      %p271 = por %p269, %p270
      %p272 = scmp.ne.s32.totalorder %s263, %s264
      %p273 = scmp.eq.s32.totalorder %s28, 0
      %p274 = por %p272, %p273
      %p275 = scmp.ne.s32.totalorder %s263, %s264
      %p276 = scmp.eq.s32.totalorder %s29, 1
      %p277 = por %p275, %p276
      %p279 = scmp.ne.s32.totalorder %s264, %s278
      %p280 = scmp.eq.s32.totalorder %s29, 0
      %p281 = por %p279, %p280
      %s283 = sadd.s32 %s282, 1
      %p286 = scmp.eq.s32.totalorder %s23, 1
      %p287 = scmp.ne.s32.totalorder %s282, %s284
      %p288 = scmp.eq.s32.totalorder %s23, 0
      %p289 = por %p287, %p288
      %p290 = scmp.ne.s32.totalorder %s282, %s284
      %p291 = scmp.eq.s32.totalorder %s28, 1
      %p292 = por %p290, %p291
      %p293 = scmp.ne.s32.totalorder %s284, %s285
      %p294 = scmp.eq.s32.totalorder %s28, 0
      %p295 = por %p293, %p294
      %p296 = scmp.ne.s32.totalorder %s284, %s285
      %p297 = scmp.eq.s32.totalorder %s29, 1
      %p298 = por %p296, %p297
      %p300 = scmp.ne.s32.totalorder %s285, %s299
      %p301 = scmp.eq.s32.totalorder %s29, 0
      %p302 = por %p300, %p301
      %s303 = ssub.s32 %s23, %s30
      %p304 = scmp.eq.s32.totalorder %s303, 0
      %s306 = sadd.s32 %s305, 1
      %s307 = scalar_select %p304, %s305, %s306
      %p310 = pneg %p304
      %p311 = scmp.eq.s32.totalorder %s23, 1
      %p312 = por %p310, %p311
      %p313 = scmp.ne.s32.totalorder %s305, %s308
      %p314 = scmp.eq.s32.totalorder %s23, 0
      %p315 = por %p313, %p314
      %p316 = scmp.ne.s32.totalorder %s305, %s308
      %p317 = scmp.eq.s32.totalorder %s28, 1
      %p318 = por %p316, %p317
      %p319 = scmp.ne.s32.totalorder %s308, %s309
      %p320 = scmp.eq.s32.totalorder %s28, 0
      %p321 = por %p319, %p320
      %p322 = scmp.ne.s32.totalorder %s308, %s309
      %p323 = scmp.eq.s32.totalorder %s29, 1
      %p324 = por %p322, %p323
      %p326 = scmp.ne.s32.totalorder %s309, %s325
      %p327 = scmp.eq.s32.totalorder %s29, 0
      %p328 = por %p326, %p327
      %p329 = scmp.le.s32.totalorder 1, %s23
      %p330 = scmp.lt.s32.totalorder %s23, 3
      %p331 = pnand %p329, %p330
      %p332 = pneg %p331
      // Predicated region
      $region9: #{tpu_custom_call.1} parent=5 // pred_check
        _
      $region10: #{tpu_custom_call.1} parent=5 // pred_check_branch
        %334 = sbr.rel (%p331) target = $region12
      $region11: #{tpu_custom_call.1} parent=5 // pred_region
        %s335 = ssub.s32 %s23, 1
        // Predicated region
        $region13: #{tpu_custom_call.1} parent=11 // pred_check
          %p336 = pneg %p148
        $region14: #{tpu_custom_call.1} parent=11 // pred_check_branch
          %338 = sbr.rel (%p336) target = $region16
        $region15: #{tpu_custom_call.1} parent=11 // pred_region
          _
        $region16: #{tpu_custom_call.1} parent=11 // pred_fallthru
          _
        // Predicated region
        $region17: #{tpu_custom_call.1} parent=11 // pred_check
          %p339 = pneg %p169
        $region18: #{tpu_custom_call.1} parent=11 // pred_check_branch
          %341 = sbr.rel (%p339) target = $region20
        $region19: #{tpu_custom_call.1} parent=11 // pred_region
          _
        $region20: #{tpu_custom_call.1} parent=11 // pred_fallthru
          _
        // Predicated region
        $region21: #{tpu_custom_call.1} parent=11 // pred_check
          %p342 = pneg %p190
        $region22: #{tpu_custom_call.1} parent=11 // pred_check_branch
          %344 = sbr.rel (%p342) target = $region24
        $region23: #{tpu_custom_call.1} parent=11 // pred_region
          _
        $region24: #{tpu_custom_call.1} parent=11 // pred_fallthru
          _
        // Predicated region
        $region25: #{tpu_custom_call.1} parent=11 // pred_check
          %p345 = pneg %p211
        $region26: #{tpu_custom_call.1} parent=11 // pred_check_branch
          %347 = sbr.rel (%p345) target = $region28
        $region27: #{tpu_custom_call.1} parent=11 // pred_region
          _
        $region28: #{tpu_custom_call.1} parent=11 // pred_fallthru
          _
        // Predicated region
        $region29: #{tpu_custom_call.1} parent=11 // pred_check
          %p348 = pneg %p232
        $region30: #{tpu_custom_call.1} parent=11 // pred_check_branch
          %350 = sbr.rel (%p348) target = $region32
        $region31: #{tpu_custom_call.1} parent=11 // pred_region
          _
        $region32: #{tpu_custom_call.1} parent=11 // pred_fallthru
          _
        // Predicated region
        $region33: #{tpu_custom_call.1} parent=11 // pred_check
          %p351 = pneg %p253
        $region34: #{tpu_custom_call.1} parent=11 // pred_check_branch
          %353 = sbr.rel (%p351) target = $region36
        $region35: #{tpu_custom_call.1} parent=11 // pred_region
          _
        $region36: #{tpu_custom_call.1} parent=11 // pred_fallthru
          _
        // Predicated region
        $region37: #{tpu_custom_call.1} parent=11 // pred_check
          %p354 = pneg %p274
        $region38: #{tpu_custom_call.1} parent=11 // pred_check_branch
          %356 = sbr.rel (%p354) target = $region40
        $region39: #{tpu_custom_call.1} parent=11 // pred_region
          _
        $region40: #{tpu_custom_call.1} parent=11 // pred_fallthru
          _
        // Predicated region
        $region41: #{tpu_custom_call.1} parent=11 // pred_check
          %p357 = pneg %p295
        $region42: #{tpu_custom_call.1} parent=11 // pred_check_branch
          %359 = sbr.rel (%p357) target = $region44
        $region43: #{tpu_custom_call.1} parent=11 // pred_region
          _
        $region44: #{tpu_custom_call.1} parent=11 // pred_fallthru
          _
      $region12: #{tpu_custom_call.1} parent=5 // pred_fallthru
        _
      %p360 = scmp.lt.s32.totalorder %s23, 2
      // Predicated region
      $region45: #{tpu_custom_call.1} parent=5 // pred_check
        %p361 = pneg %p360
      $region46: #{tpu_custom_call.1} parent=5 // pred_check_branch
        %363 = sbr.rel (%p361) target = $region48
      $region47: #{tpu_custom_call.1} parent=5 // pred_region
        // Predicated region
        $region49: #{tpu_custom_call.1} parent=47 // pred_check
          %p364 = pneg %p43
        $region50: #{tpu_custom_call.1} parent=47 // pred_check_branch
          %366 = sbr.rel (%p364) target = $region52
        $region51: #{tpu_custom_call.1} parent=47 // pred_region
          %p367 = scmp.lt.s32.totalorder %s23, 1
          %s368 = scalar_select %p367, %s23, 1
          %s369 = smul.addr %s368, 32
          %s370 = smul.addr %s369, 4
          %s371 = scalar_lea.vmem %s0, %s370
        $region52: #{tpu_custom_call.1} parent=47 // pred_fallthru
          _
        // Predicated region
        $region53: #{tpu_custom_call.1} parent=47 // pred_check
          %p372 = pneg %p69
        $region54: #{tpu_custom_call.1} parent=47 // pred_check_branch
          %374 = sbr.rel (%p372) target = $region56
        $region55: #{tpu_custom_call.1} parent=47 // pred_region
          %p375 = scmp.lt.s32.totalorder %s23, 1
          %s376 = scalar_select %p375, %s23, 1
          %s377 = smul.addr %s376, 16
          %s378 = smul.addr %s377, 4
          %s379 = scalar_lea.vmem %s1, %s378
        $region56: #{tpu_custom_call.1} parent=47 // pred_fallthru
          _
        // Predicated region
        $region57: #{tpu_custom_call.1} parent=47 // pred_check
          %p380 = pneg %p95
        $region58: #{tpu_custom_call.1} parent=47 // pred_check_branch
          %382 = sbr.rel (%p380) target = $region60
        $region59: #{tpu_custom_call.1} parent=47 // pred_region
          %p383 = scmp.lt.s32.totalorder %s23, 1
          %s384 = scalar_select %p383, %s23, 1
          %s385 = smul.addr %s384, 16
          %s386 = smul.addr %s385, 4
          %s387 = scalar_lea.vmem %s2, %s386
        $region60: #{tpu_custom_call.1} parent=47 // pred_fallthru
          _
        // Predicated region
        $region61: #{tpu_custom_call.1} parent=47 // pred_check
          %p388 = pneg %p121
        $region62: #{tpu_custom_call.1} parent=47 // pred_check_branch
          %390 = sbr.rel (%p388) target = $region64
        $region63: #{tpu_custom_call.1} parent=47 // pred_region
          %p391 = scmp.lt.s32.totalorder %s23, 1
          %s392 = scalar_select %p391, %s23, 1
          %s393 = scalar_lea.vmem %s3, %s392
        $region64: #{tpu_custom_call.1} parent=47 // pred_fallthru
          _
      $region48: #{tpu_custom_call.1} parent=5 // pred_fallthru
        _
      %p394 = scmp.le.s32.totalorder 1, %s23
      %p395 = scmp.lt.s32.totalorder %s23, 3
      %p396 = pnand %p394, %p395
      %p397 = pneg %p396
      // Predicated region
      $region65: #{tpu_custom_call.1} parent=5 // pred_check
        _
      $region66: #{tpu_custom_call.1} parent=5 // pred_check_branch
        %399 = sbr.rel (%p396) target = $region68
      $region67: #{tpu_custom_call.1} parent=5 // pred_region
        %s400 = ssub.s32 %s23, 1
        %p401 = scmp.lt.s32.totalorder %s28, 1
        %s402 = scalar_select %p401, %s28, 1
        %s403 = smul.addr %s402, 32
        %s404 = smul.addr %s403, 4
        %s405 = scalar_lea.vmem %s0, %s404
        %p406 = pneg %p49
        %p407 = pneg %p46
        %p408 = scmp.lt.s32.totalorder %s28, 1
        %s409 = scalar_select %p408, %s28, 1
        %s410 = smul.addr %s409, 16
        %s411 = smul.addr %s410, 4
        %s412 = scalar_lea.vmem %s1, %s411
        %p413 = pneg %p75
        %p414 = pneg %p72
        %p415 = scmp.lt.s32.totalorder %s28, 1
        %s416 = scalar_select %p415, %s28, 1
        %s417 = smul.addr %s416, 16
        %s418 = smul.addr %s417, 4
        %s419 = scalar_lea.vmem %s2, %s418
        %p420 = pneg %p101
        %p421 = pneg %p98
        %p422 = scmp.lt.s32.totalorder %s28, 1
        %s423 = scalar_select %p422, %s28, 1
        %s424 = scalar_lea.vmem %s3, %s423
        %p425 = pneg %p127
        %p426 = pneg %p124
        %p427 = pneg %p148
        %p428 = pneg %p145
        %p429 = pneg %p169
        %p430 = pneg %p166
        %p431 = pneg %p190
        %p432 = pneg %p187
        %p433 = pneg %p211
        %p434 = pneg %p208
        %p435 = pneg %p232
        %p436 = pneg %p229
        %p437 = pneg %p253
        %p438 = pneg %p250
        %p439 = pneg %p274
        %p440 = pneg %p271
        %p441 = pneg %p295
        %p442 = pneg %p292
        %p443 = pneg %p321
        %p444 = pneg %p318
        %s445 = sand.u32 %s308, 1
        %s446 = scalar_lea.sflag [#allocation4], %s445
        %s447 = sand.u32 %s308, 1
        %s448 = scalar_lea.vmem [#allocation3], %s447
        %p449 = scmp.lt.s32.totalorder %s28, 1
        %s450 = scalar_select %p449, %s28, 1
        %s451 = smul.addr %s450, 32
        %s452 = smul.addr %s451, 4
        %s453 = scalar_lea.vmem %s0, %s452
        %p454 = scmp.lt.s32.totalorder %s28, 1
        %s455 = scalar_select %p454, %s28, 1
        %s456 = smul.addr %s455, 16
        %s457 = smul.addr %s456, 4
        %s458 = scalar_lea.vmem %s1, %s457
        %p459 = scmp.lt.s32.totalorder %s28, 1
        %s460 = scalar_select %p459, %s28, 1
        %s461 = smul.addr %s460, 16
        %s462 = smul.addr %s461, 4
        %s463 = scalar_lea.vmem %s2, %s462
        %p464 = scmp.lt.s32.totalorder %s28, 1
        %s465 = scalar_select %p464, %s28, 1
        %s466 = scalar_lea.vmem %s3, %s465
        %v468 = vld [vmem:[%s453] sm:$0xf]
        %v469 = vld [vmem:[%s453 + $0x4] sm:$0xf]
        %v470 = vld [vmem:[%s453 + $0x8] sm:$0xf]
        %v471 = vld [vmem:[%s453 + $0xc] sm:$0xf]
        %v472 = vld [vmem:[%s453 + $0x10] sm:$0xf]
        %v473 = vld [vmem:[%s453 + $0x14] sm:$0xf]
        %v474 = vld [vmem:[%s453 + $0x18] sm:$0xf]
        %v475 = vld [vmem:[%s453 + $0x1c] sm:$0xf]
        %v476 = vld [vmem:[%s453 + $0x20] sm:$0xf]
        %v477 = vld [vmem:[%s453 + $0x24] sm:$0xf]
        %v478 = vld [vmem:[%s453 + $0x28] sm:$0xf]
        %v479 = vld [vmem:[%s453 + $0x2c] sm:$0xf]
        %v480 = vld [vmem:[%s453 + $0x30] sm:$0xf]
        %v481 = vld [vmem:[%s453 + $0x34] sm:$0xf]
        %v482 = vld [vmem:[%s453 + $0x38] sm:$0xf]
        %v483 = vld [vmem:[%s453 + $0x3c] sm:$0xf]
        %v484 = vld [vmem:[%s453 + $0x40] sm:$0xf]
        %v485 = vld [vmem:[%s453 + $0x44] sm:$0xf]
        %v486 = vld [vmem:[%s453 + $0x48] sm:$0xf]
        %v487 = vld [vmem:[%s453 + $0x4c] sm:$0xf]
        %v488 = vld [vmem:[%s453 + $0x50] sm:$0xf]
        %v489 = vld [vmem:[%s453 + $0x54] sm:$0xf]
        %v490 = vld [vmem:[%s453 + $0x58] sm:$0xf]
        %v491 = vld [vmem:[%s453 + $0x5c] sm:$0xf]
        %v492 = vld [vmem:[%s453 + $0x60] sm:$0xf]
        %v493 = vld [vmem:[%s453 + $0x64] sm:$0xf]
        %v494 = vld [vmem:[%s453 + $0x68] sm:$0xf]
        %v495 = vld [vmem:[%s453 + $0x6c] sm:$0xf]
        %v496 = vld [vmem:[%s453 + $0x70] sm:$0xf]
        %v497 = vld [vmem:[%s453 + $0x74] sm:$0xf]
        %v498 = vld [vmem:[%s453 + $0x78] sm:$0xf]
        %v499 = vld [vmem:[%s453 + $0x7c] sm:$0xf]
        %v500 = vld [vmem:[%s458] sm:$0xf]
        %v501 = vld [vmem:[%s458 + $0x4] sm:$0xf]
        %v502 = vld [vmem:[%s458 + $0x8] sm:$0xf]
        %v503 = vld [vmem:[%s458 + $0xc] sm:$0xf]
        %v504 = vld [vmem:[%s458 + $0x10] sm:$0xf]
        %v505 = vld [vmem:[%s458 + $0x14] sm:$0xf]
        %v506 = vld [vmem:[%s458 + $0x18] sm:$0xf]
        %v507 = vld [vmem:[%s458 + $0x1c] sm:$0xf]
        %v508 = vld [vmem:[%s458 + $0x20] sm:$0xf]
        %v509 = vld [vmem:[%s458 + $0x24] sm:$0xf]
        %v510 = vld [vmem:[%s458 + $0x28] sm:$0xf]
        %v511 = vld [vmem:[%s458 + $0x2c] sm:$0xf]
        %v512 = vld [vmem:[%s458 + $0x30] sm:$0xf]
        %v513 = vld [vmem:[%s458 + $0x34] sm:$0xf]
        %v514 = vld [vmem:[%s458 + $0x38] sm:$0xf]
        %v515 = vld [vmem:[%s458 + $0x3c] sm:$0xf]
        %v516 = vld [vmem:[%s463] sm:$0xf]
        %v517 = vld [vmem:[%s463 + $0x4] sm:$0xf]
        %v518 = vld [vmem:[%s463 + $0x8] sm:$0xf]
        %v519 = vld [vmem:[%s463 + $0xc] sm:$0xf]
        %v520 = vld [vmem:[%s463 + $0x10] sm:$0xf]
        %v521 = vld [vmem:[%s463 + $0x14] sm:$0xf]
        %v522 = vld [vmem:[%s463 + $0x18] sm:$0xf]
        %v523 = vld [vmem:[%s463 + $0x1c] sm:$0xf]
        %v524 = vld [vmem:[%s463 + $0x20] sm:$0xf]
        %v525 = vld [vmem:[%s463 + $0x24] sm:$0xf]
        %v526 = vld [vmem:[%s463 + $0x28] sm:$0xf]
        %v527 = vld [vmem:[%s463 + $0x2c] sm:$0xf]
        %v528 = vld [vmem:[%s463 + $0x30] sm:$0xf]
        %v529 = vld [vmem:[%s463 + $0x34] sm:$0xf]
        %v530 = vld [vmem:[%s463 + $0x38] sm:$0xf]
        %v531 = vld [vmem:[%s463 + $0x3c] sm:$0xf]
        %v548 = vunpack.c.l.b16 %v468
        %v549 = vunpack.c.l.b16 %v469
        %v550 = vunpack.c.l.b16 %v470
        %v551 = vunpack.c.l.b16 %v471
        %v552 = vunpack.c.l.b16 %v472
        %v553 = vunpack.c.l.b16 %v473
        %v554 = vunpack.c.l.b16 %v474
        %v555 = vunpack.c.l.b16 %v475
        %v556 = vunpack.c.l.b16 %v476
        %v557 = vunpack.c.l.b16 %v477
        %v558 = vunpack.c.l.b16 %v478
        %v559 = vunpack.c.l.b16 %v479
        %v560 = vunpack.c.l.b16 %v480
        %v561 = vunpack.c.l.b16 %v481
        %v562 = vunpack.c.l.b16 %v482
        %v563 = vunpack.c.l.b16 %v483
        %v564 = vpack.c.b16 %v549, %v548
        %v565 = vpack.c.b16 %v551, %v550
        %v566 = vpack.c.b16 %v553, %v552
        %v567 = vpack.c.b16 %v555, %v554
        %v568 = vpack.c.b16 %v557, %v556
        %v569 = vpack.c.b16 %v559, %v558
        %v570 = vpack.c.b16 %v561, %v560
        %v571 = vpack.c.b16 %v563, %v562
        %v588 = vunpack.c.l.b16 %v484
        %v589 = vunpack.c.l.b16 %v485
        %v590 = vunpack.c.l.b16 %v486
        %v591 = vunpack.c.l.b16 %v487
        %v592 = vunpack.c.l.b16 %v488
        %v593 = vunpack.c.l.b16 %v489
        %v594 = vunpack.c.l.b16 %v490
        %v595 = vunpack.c.l.b16 %v491
        %v596 = vunpack.c.l.b16 %v492
        %v597 = vunpack.c.l.b16 %v493
        %v598 = vunpack.c.l.b16 %v494
        %v599 = vunpack.c.l.b16 %v495
        %v600 = vunpack.c.l.b16 %v496
        %v601 = vunpack.c.l.b16 %v497
        %v602 = vunpack.c.l.b16 %v498
        %v603 = vunpack.c.l.b16 %v499
        %v604 = vpack.c.b16 %v589, %v588
        %v605 = vpack.c.b16 %v591, %v590
        %v606 = vpack.c.b16 %v593, %v592
        %v607 = vpack.c.b16 %v595, %v594
        %v608 = vpack.c.b16 %v597, %v596
        %v609 = vpack.c.b16 %v599, %v598
        %v610 = vpack.c.b16 %v601, %v600
        %v611 = vpack.c.b16 %v603, %v602
        %vm612 = vcmask 261120
        %v614 = vsel %vm612, %v564, 0
        %v617 = vsel %vm612, %v565, 0
        %v620 = vsel %vm612, %v566, 0
        %v623 = vsel %vm612, %v567, 0
        %v626 = vsel %vm612, %v568, 0
        %v629 = vsel %vm612, %v569, 0
        %v632 = vsel %vm612, %v570, 0
        %v635 = vsel %vm612, %v571, 0
        %v638 = vsel %vm612, %v604, 0
        %v641 = vsel %vm612, %v605, 0
        %v644 = vsel %vm612, %v606, 0
        %v647 = vsel %vm612, %v607, 0
        %v650 = vsel %vm612, %v608, 0
        %v653 = vsel %vm612, %v609, 0
        %v656 = vsel %vm612, %v610, 0
        %v659 = vsel %vm612, %v611, 0
        %661 = vmatprep.subr.bf16.mxu0 0
        %662 = vmatpush1.bf16.xpose.msra.mxu0 %v659
        %663 = vmatprep.subr.bf16.mxu0 0
        %664 = vmatpush1.bf16.xpose.msra.mxu0 %v656
        %665 = vmatprep.subr.bf16.mxu0 0
        %666 = vmatpush1.bf16.xpose.msra.mxu0 %v653
        %667 = vmatprep.subr.bf16.mxu0 0
        %668 = vmatpush1.bf16.xpose.msra.mxu0 %v650
        %669 = vmatprep.subr.bf16.mxu0 0
        %670 = vmatpush1.bf16.xpose.msra.mxu0 %v647
        %671 = vmatprep.subr.bf16.mxu0 0
        %672 = vmatpush1.bf16.xpose.msra.mxu0 %v644
        %673 = vmatprep.subr.bf16.mxu0 0
        %674 = vmatpush1.bf16.xpose.msra.mxu0 %v641
        %675 = vmatprep.subr.bf16.mxu0 0
        %676 = vmatpush1.bf16.xpose.msra.mxu0 %v638
        %677 = vmatprep.subr.bf16.mxu0 0
        %678 = vmatpush2.bf16.xpose.msra.mxu0 0
        %679 = vmatprep.subr.bf16.mxu0 0
        %680 = vmatpush2.bf16.xpose.msra.mxu0 0
        %681 = vmatprep.subr.bf16.mxu0 0
        %682 = vmatpush2.bf16.xpose.msra.mxu0 0
        %683 = vmatprep.subr.bf16.mxu0 0
        %684 = vmatpush2.bf16.xpose.msra.mxu0 0
        %685 = vmatprep.subr.bf16.mxu0 0
        %686 = vmatpush2.bf16.xpose.msra.mxu0 0
        %687 = vmatprep.subr.bf16.mxu0 0
        %688 = vmatpush2.bf16.xpose.msra.mxu0 0
        %689 = vmatprep.subr.bf16.mxu0 0
        %690 = vmatpush2.bf16.xpose.msra.mxu0 0
        %691 = vmatprep.subr.bf16.mxu0 0
        %692 = vmatpush2.bf16.xpose.msra.mxu0 0
        %693 = vmatprep.mubr.bf16.mxu0 0
        %694 = vmatmul.mubr.bf16.gmra.mxu0 %v614
        %v695 = vpop.f32.mrf.mxu0
        %v696 = vadd.f32 0.0, %v695
        %v697 = vpop.f32.mrf.mxu0
        %v698 = vpop.f32.mrf.mxu0
        %v699 = vadd.f32 0.0, %v698
        %v700 = vpop.f32.mrf.mxu0
        %701 = vmatprep.mubr.bf16.mxu0 0
        %702 = vmatmul.mubr.bf16.gmra.mxu0 %v617
        %v703 = vpop.f32.mrf.mxu0
        %v704 = vadd.f32 0.0, %v703
        %v705 = vpop.f32.mrf.mxu0
        %v706 = vpop.f32.mrf.mxu0
        %v707 = vadd.f32 0.0, %v706
        %v708 = vpop.f32.mrf.mxu0
        %709 = vmatprep.mubr.bf16.mxu0 0
        %710 = vmatmul.mubr.bf16.gmra.mxu0 %v620
        %v711 = vpop.f32.mrf.mxu0
        %v712 = vadd.f32 0.0, %v711
        %v713 = vpop.f32.mrf.mxu0
        %v714 = vpop.f32.mrf.mxu0
        %v715 = vadd.f32 0.0, %v714
        %v716 = vpop.f32.mrf.mxu0
        %717 = vmatprep.mubr.bf16.mxu0 0
        %718 = vmatmul.mubr.bf16.gmra.mxu0 %v623
        %v719 = vpop.f32.mrf.mxu0
        %v720 = vadd.f32 0.0, %v719
        %v721 = vpop.f32.mrf.mxu0
        %v722 = vpop.f32.mrf.mxu0
        %v723 = vadd.f32 0.0, %v722
        %v724 = vpop.f32.mrf.mxu0
        %725 = vmatprep.mubr.bf16.mxu0 0
        %726 = vmatmul.mubr.bf16.gmra.mxu0 %v626
        %v727 = vpop.f32.mrf.mxu0
        %v728 = vadd.f32 0.0, %v727
        %v729 = vpop.f32.mrf.mxu0
        %v730 = vpop.f32.mrf.mxu0
        %v731 = vadd.f32 0.0, %v730
        %v732 = vpop.f32.mrf.mxu0
        %733 = vmatprep.mubr.bf16.mxu0 0
        %734 = vmatmul.mubr.bf16.gmra.mxu0 %v629
        %v735 = vpop.f32.mrf.mxu0
        %v736 = vadd.f32 0.0, %v735
        %v737 = vpop.f32.mrf.mxu0
        %v738 = vpop.f32.mrf.mxu0
        %v739 = vadd.f32 0.0, %v738
        %v740 = vpop.f32.mrf.mxu0
        %741 = vmatprep.mubr.bf16.mxu0 0
        %742 = vmatmul.mubr.bf16.gmra.mxu0 %v632
        %v743 = vpop.f32.mrf.mxu0
        %v744 = vadd.f32 0.0, %v743
        %v745 = vpop.f32.mrf.mxu0
        %v746 = vpop.f32.mrf.mxu0
        %v747 = vadd.f32 0.0, %v746
        %v748 = vpop.f32.mrf.mxu0
        %749 = vmatprep.mubr.bf16.mxu0 0
        %750 = vmatmul.mubr.bf16.gmra.mxu0 %v635
        %v751 = vpop.f32.mrf.mxu0
        %v752 = vadd.f32 0.0, %v751
        %v753 = vpop.f32.mrf.mxu0
        %v754 = vpop.f32.mrf.mxu0
        %v755 = vadd.f32 0.0, %v754
        %v756 = vpop.f32.mrf.mxu0
        %757 = vdwg.mxu0
        %v758 = vld [vmem:[%s4] sm:$0xff]
        %v759 = vld [vmem:[%s4 + $0x8] sm:$0xff]
        %v760 = vld [vmem:[%s4 + $0x10] sm:$0xff]
        %v761 = vld [vmem:[%s4 + $0x18] sm:$0xff]
        %v762 = vld [vmem:[%s4 + $0x20] sm:$0xff]
        %v763 = vld [vmem:[%s4 + $0x28] sm:$0xff]
        %v764 = vld [vmem:[%s4 + $0x30] sm:$0xff]
        %v765 = vld [vmem:[%s4 + $0x38] sm:$0xff]
        %v766 = vld [vmem:[%s4 + $0x40] sm:$0xff]
        %v767 = vld [vmem:[%s4 + $0x48] sm:$0xff]
        %v768 = vld [vmem:[%s4 + $0x50] sm:$0xff]
        %v769 = vld [vmem:[%s4 + $0x58] sm:$0xff]
        %v770 = vld [vmem:[%s4 + $0x60] sm:$0xff]
        %v771 = vld [vmem:[%s4 + $0x68] sm:$0xff]
        %v772 = vld [vmem:[%s4 + $0x70] sm:$0xff]
        %v773 = vld [vmem:[%s4 + $0x78] sm:$0xff]
        %v774 = vld [vmem:[%s466] sm:$0x1]
        %776 = vset.pattern.permute.xlu0 0
        %777 = vperm.xlu0 %776, %v758
        %v778 = vpop.permute.xlu0 %777
        %781 = vset.pattern.permute.xlu0 0
        %782 = vperm.xlu0 %781, %v759
        %v783 = vpop.permute.xlu0 %782
        %786 = vset.pattern.permute.xlu0 0
        %787 = vperm.xlu0 %786, %v760
        %v788 = vpop.permute.xlu0 %787
        %791 = vset.pattern.permute.xlu0 0
        %792 = vperm.xlu0 %791, %v761
        %v793 = vpop.permute.xlu0 %792
        %796 = vset.pattern.permute.xlu0 0
        %797 = vperm.xlu0 %796, %v762
        %v798 = vpop.permute.xlu0 %797
        %801 = vset.pattern.permute.xlu0 0
        %802 = vperm.xlu0 %801, %v763
        %v803 = vpop.permute.xlu0 %802
        %806 = vset.pattern.permute.xlu0 0
        %807 = vperm.xlu0 %806, %v764
        %v808 = vpop.permute.xlu0 %807
        %811 = vset.pattern.permute.xlu0 0
        %812 = vperm.xlu0 %811, %v765
        %v813 = vpop.permute.xlu0 %812
        %816 = vset.pattern.permute.xlu0 0
        %817 = vperm.xlu0 %816, %v766
        %v818 = vpop.permute.xlu0 %817
        %821 = vset.pattern.permute.xlu0 0
        %822 = vperm.xlu0 %821, %v767
        %v823 = vpop.permute.xlu0 %822
        %826 = vset.pattern.permute.xlu0 0
        %827 = vperm.xlu0 %826, %v768
        %v828 = vpop.permute.xlu0 %827
        %831 = vset.pattern.permute.xlu0 0
        %832 = vperm.xlu0 %831, %v769
        %v833 = vpop.permute.xlu0 %832
        %836 = vset.pattern.permute.xlu0 0
        %837 = vperm.xlu0 %836, %v770
        %v838 = vpop.permute.xlu0 %837
        %841 = vset.pattern.permute.xlu0 0
        %842 = vperm.xlu0 %841, %v771
        %v843 = vpop.permute.xlu0 %842
        %846 = vset.pattern.permute.xlu0 0
        %847 = vperm.xlu0 %846, %v772
        %v848 = vpop.permute.xlu0 %847
        %851 = vset.pattern.permute.xlu0 0
        %852 = vperm.xlu0 %851, %v773
        %v853 = vpop.permute.xlu0 %852
        %v856 = vlaneseq
        %v857 = vshrl.u32 %v856, 7
        %v858 = vsub.s32 0, %v857
        %v859 = vrot.slane %v774, %v858
        %vm861 = vcmp.eq.f32.partialorder %v778, %v859
        %vm862 = vcmp.eq.f32.partialorder %v783, %v859
        %vm863 = vcmp.eq.f32.partialorder %v788, %v859
        %vm864 = vcmp.eq.f32.partialorder %v793, %v859
        %vm865 = vcmp.eq.f32.partialorder %v798, %v859
        %vm866 = vcmp.eq.f32.partialorder %v803, %v859
        %vm867 = vcmp.eq.f32.partialorder %v808, %v859
        %vm868 = vcmp.eq.f32.partialorder %v813, %v859
        %vm869 = vcmp.eq.f32.partialorder %v818, %v859
        %vm870 = vcmp.eq.f32.partialorder %v823, %v859
        %vm871 = vcmp.eq.f32.partialorder %v828, %v859
        %vm872 = vcmp.eq.f32.partialorder %v833, %v859
        %vm873 = vcmp.eq.f32.partialorder %v838, %v859
        %vm874 = vcmp.eq.f32.partialorder %v843, %v859
        %vm875 = vcmp.eq.f32.partialorder %v848, %v859
        %vm876 = vcmp.eq.f32.partialorder %v853, %v859
        %v877 = vsel %vm861, %v696, -1e+09
        %v878 = vsel %vm862, %v699, -1e+09
        %v879 = vsel %vm863, %v704, -1e+09
        %v880 = vsel %vm864, %v707, -1e+09
        %v881 = vsel %vm865, %v712, -1e+09
        %v882 = vsel %vm866, %v715, -1e+09
        %v883 = vsel %vm867, %v720, -1e+09
        %v884 = vsel %vm868, %v723, -1e+09
        %v885 = vsel %vm869, %v728, -1e+09
        %v886 = vsel %vm870, %v731, -1e+09
        %v887 = vsel %vm871, %v736, -1e+09
        %v888 = vsel %vm872, %v739, -1e+09
        %v889 = vsel %vm873, %v744, -1e+09
        %v890 = vsel %vm874, %v747, -1e+09
        %v891 = vsel %vm875, %v752, -1e+09
        %v892 = vsel %vm876, %v755, -1e+09
        %893 = vmax.xlane.f32.xlu0 %v877
        %v894 = vpop.xlane.xlu0 %893
        %895 = vmax.xlane.f32.xlu0 %v878
        %v896 = vpop.xlane.xlu0 %895
        %897 = vmax.xlane.f32.xlu0 %v879
        %v898 = vpop.xlane.xlu0 %897
        %899 = vmax.xlane.f32.xlu0 %v880
        %v900 = vpop.xlane.xlu0 %899
        %901 = vmax.xlane.f32.xlu0 %v881
        %v902 = vpop.xlane.xlu0 %901
        %903 = vmax.xlane.f32.xlu0 %v882
        %v904 = vpop.xlane.xlu0 %903
        %905 = vmax.xlane.f32.xlu0 %v883
        %v906 = vpop.xlane.xlu0 %905
        %907 = vmax.xlane.f32.xlu0 %v884
        %v908 = vpop.xlane.xlu0 %907
        %909 = vmax.xlane.f32.xlu0 %v885
        %v910 = vpop.xlane.xlu0 %909
        %911 = vmax.xlane.f32.xlu0 %v886
        %v912 = vpop.xlane.xlu0 %911
        %913 = vmax.xlane.f32.xlu0 %v887
        %v914 = vpop.xlane.xlu0 %913
        %915 = vmax.xlane.f32.xlu0 %v888
        %v916 = vpop.xlane.xlu0 %915
        %917 = vmax.xlane.f32.xlu0 %v889
        %v918 = vpop.xlane.xlu0 %917
        %919 = vmax.xlane.f32.xlu0 %v890
        %v920 = vpop.xlane.xlu0 %919
        %921 = vmax.xlane.f32.xlu0 %v891
        %v922 = vpop.xlane.xlu0 %921
        %923 = vmax.xlane.f32.xlu0 %v892
        %v924 = vpop.xlane.xlu0 %923
        %v925 = vsub.f32 %v877, %v894
        %v926 = vsub.f32 %v878, %v896
        %v927 = vsub.f32 %v879, %v898
        %v928 = vsub.f32 %v880, %v900
        %v929 = vsub.f32 %v881, %v902
        %v930 = vsub.f32 %v882, %v904
        %v931 = vsub.f32 %v883, %v906
        %v932 = vsub.f32 %v884, %v908
        %v933 = vsub.f32 %v885, %v910
        %v934 = vsub.f32 %v886, %v912
        %v935 = vsub.f32 %v887, %v914
        %v936 = vsub.f32 %v888, %v916
        %v937 = vsub.f32 %v889, %v918
        %v938 = vsub.f32 %v890, %v920
        %v939 = vsub.f32 %v891, %v922
        %v940 = vsub.f32 %v892, %v924
        %v941 = vmul.f32 %v925, 1.442695
        %v942 = vpow.pop %v941
        %v943 = vmul.f32 %v926, 1.442695
        %v944 = vpow.pop %v943
        %v945 = vmul.f32 %v927, 1.442695
        %v946 = vpow.pop %v945
        %v947 = vmul.f32 %v928, 1.442695
        %v948 = vpow.pop %v947
        %v949 = vmul.f32 %v929, 1.442695
        %v950 = vpow.pop %v949
        %v951 = vmul.f32 %v930, 1.442695
        %v952 = vpow.pop %v951
        %v953 = vmul.f32 %v931, 1.442695
        %v954 = vpow.pop %v953
        %v955 = vmul.f32 %v932, 1.442695
        %v956 = vpow.pop %v955
        %v957 = vmul.f32 %v933, 1.442695
        %v958 = vpow.pop %v957
        %v959 = vmul.f32 %v934, 1.442695
        %v960 = vpow.pop %v959
        %v961 = vmul.f32 %v935, 1.442695
        %v962 = vpow.pop %v961
        %v963 = vmul.f32 %v936, 1.442695
        %v964 = vpow.pop %v963
        %v965 = vmul.f32 %v937, 1.442695
        %v966 = vpow.pop %v965
        %v967 = vmul.f32 %v938, 1.442695
        %v968 = vpow.pop %v967
        %v969 = vmul.f32 %v939, 1.442695
        %v970 = vpow.pop %v969
        %v971 = vmul.f32 %v940, 1.442695
        %v972 = vpow.pop %v971
        %973 = vadd.xlane.f32.xlu0 %v942
        %v974 = vpop.xlane.xlu0 %973
        %975 = vadd.xlane.f32.xlu0 %v944
        %v976 = vpop.xlane.xlu0 %975
        %977 = vadd.xlane.f32.xlu0 %v946
        %v978 = vpop.xlane.xlu0 %977
        %979 = vadd.xlane.f32.xlu0 %v948
        %v980 = vpop.xlane.xlu0 %979
        %981 = vadd.xlane.f32.xlu0 %v950
        %v982 = vpop.xlane.xlu0 %981
        %983 = vadd.xlane.f32.xlu0 %v952
        %v984 = vpop.xlane.xlu0 %983
        %985 = vadd.xlane.f32.xlu0 %v954
        %v986 = vpop.xlane.xlu0 %985
        %987 = vadd.xlane.f32.xlu0 %v956
        %v988 = vpop.xlane.xlu0 %987
        %989 = vadd.xlane.f32.xlu0 %v958
        %v990 = vpop.xlane.xlu0 %989
        %991 = vadd.xlane.f32.xlu0 %v960
        %v992 = vpop.xlane.xlu0 %991
        %993 = vadd.xlane.f32.xlu0 %v962
        %v994 = vpop.xlane.xlu0 %993
        %995 = vadd.xlane.f32.xlu0 %v964
        %v996 = vpop.xlane.xlu0 %995
        %997 = vadd.xlane.f32.xlu0 %v966
        %v998 = vpop.xlane.xlu0 %997
        %999 = vadd.xlane.f32.xlu0 %v968
        %v1000 = vpop.xlane.xlu0 %999
        %1001 = vadd.xlane.f32.xlu0 %v970
        %v1002 = vpop.xlane.xlu0 %1001
        %1003 = vadd.xlane.f32.xlu0 %v972
        %v1004 = vpop.xlane.xlu0 %1003
        %v1005 = vrcp.pop %v974
        %v1006 = vrcp.pop %v976
        %v1007 = vrcp.pop %v978
        %v1008 = vrcp.pop %v980
        %v1009 = vrcp.pop %v982
        %v1010 = vrcp.pop %v984
        %v1011 = vrcp.pop %v986
        %v1012 = vrcp.pop %v988
        %v1013 = vrcp.pop %v990
        %v1014 = vrcp.pop %v992
        %v1015 = vrcp.pop %v994
        %v1016 = vrcp.pop %v996
        %v1017 = vrcp.pop %v998
        %v1018 = vrcp.pop %v1000
        %v1019 = vrcp.pop %v1002
        %v1020 = vrcp.pop %v1004
        %v1021 = vmul.f32 %v942, %v1005
        %v1022 = vmul.f32 %v944, %v1006
        %v1023 = vmul.f32 %v946, %v1007
        %v1024 = vmul.f32 %v948, %v1008
        %v1025 = vmul.f32 %v950, %v1009
        %v1026 = vmul.f32 %v952, %v1010
        %v1027 = vmul.f32 %v954, %v1011
        %v1028 = vmul.f32 %v956, %v1012
        %v1029 = vmul.f32 %v958, %v1013
        %v1030 = vmul.f32 %v960, %v1014
        %v1031 = vmul.f32 %v962, %v1015
        %v1032 = vmul.f32 %v964, %v1016
        %v1033 = vmul.f32 %v966, %v1017
        %v1034 = vmul.f32 %v968, %v1018
        %v1035 = vmul.f32 %v970, %v1019
        %v1036 = vmul.f32 %v972, %v1020
        %v1037 = vpack.c.bf16 %v1022, %v1021
        %v1038 = vpack.c.bf16 %v1024, %v1023
        %v1039 = vpack.c.bf16 %v1026, %v1025
        %v1040 = vpack.c.bf16 %v1028, %v1027
        %v1041 = vpack.c.bf16 %v1030, %v1029
        %v1042 = vpack.c.bf16 %v1032, %v1031
        %v1043 = vpack.c.bf16 %v1034, %v1033
        %v1044 = vpack.c.bf16 %v1036, %v1035
        %v1061 = vunpack.c.l.b16 %v500
        %v1062 = vunpack.c.l.b16 %v501
        %v1063 = vunpack.c.l.b16 %v502
        %v1064 = vunpack.c.l.b16 %v503
        %v1065 = vunpack.c.l.b16 %v504
        %v1066 = vunpack.c.l.b16 %v505
        %v1067 = vunpack.c.l.b16 %v506
        %v1068 = vunpack.c.l.b16 %v507
        %v1069 = vunpack.c.l.b16 %v508
        %v1070 = vunpack.c.l.b16 %v509
        %v1071 = vunpack.c.l.b16 %v510
        %v1072 = vunpack.c.l.b16 %v511
        %v1073 = vunpack.c.l.b16 %v512
        %v1074 = vunpack.c.l.b16 %v513
        %v1075 = vunpack.c.l.b16 %v514
        %v1076 = vunpack.c.l.b16 %v515
        %v1077 = vpack.c.b16 %v1062, %v1061
        %v1078 = vpack.c.b16 %v1064, %v1063
        %v1079 = vpack.c.b16 %v1066, %v1065
        %v1080 = vpack.c.b16 %v1068, %v1067
        %v1081 = vpack.c.b16 %v1070, %v1069
        %v1082 = vpack.c.b16 %v1072, %v1071
        %v1083 = vpack.c.b16 %v1074, %v1073
        %v1084 = vpack.c.b16 %v1076, %v1075
        %1093 = vmatprep.subr.bf16.mxu0 0
        %1094 = vmatpush1.bf16.msra.mxu0 %v1084
        %1095 = vmatprep.subr.bf16.mxu0 0
        %1096 = vmatpush1.bf16.msra.mxu0 %v1083
        %1097 = vmatprep.subr.bf16.mxu0 0
        %1098 = vmatpush1.bf16.msra.mxu0 %v1082
        %1099 = vmatprep.subr.bf16.mxu0 0
        %1100 = vmatpush1.bf16.msra.mxu0 %v1081
        %1101 = vmatprep.subr.bf16.mxu0 0
        %1102 = vmatpush1.bf16.msra.mxu0 %v1080
        %1103 = vmatprep.subr.bf16.mxu0 0
        %1104 = vmatpush1.bf16.msra.mxu0 %v1079
        %1105 = vmatprep.subr.bf16.mxu0 0
        %1106 = vmatpush1.bf16.msra.mxu0 %v1078
        %1107 = vmatprep.subr.bf16.mxu0 0
        %1108 = vmatpush1.bf16.msra.mxu0 %v1077
        %1109 = vmatprep.subr.bf16.mxu0 0
        %1110 = vmatpush2.bf16.msra.mxu0 0
        %1111 = vmatprep.subr.bf16.mxu0 0
        %1112 = vmatpush2.bf16.msra.mxu0 0
        %1113 = vmatprep.subr.bf16.mxu0 0
        %1114 = vmatpush2.bf16.msra.mxu0 0
        %1115 = vmatprep.subr.bf16.mxu0 0
        %1116 = vmatpush2.bf16.msra.mxu0 0
        %1117 = vmatprep.subr.bf16.mxu0 0
        %1118 = vmatpush2.bf16.msra.mxu0 0
        %1119 = vmatprep.subr.bf16.mxu0 0
        %1120 = vmatpush2.bf16.msra.mxu0 0
        %1121 = vmatprep.subr.bf16.mxu0 0
        %1122 = vmatpush2.bf16.msra.mxu0 0
        %1123 = vmatprep.subr.bf16.mxu0 0
        %1124 = vmatpush2.bf16.msra.mxu0 0
        %1125 = vmatprep.mubr.bf16.mxu0 0
        %1126 = vmatmul.mubr.bf16.gmra.mxu0 %v1037
        %v1127 = vpop.f32.mrf.mxu0
        %v1128 = vadd.f32 0.0, %v1127
        %v1129 = vpop.f32.mrf.mxu0
        %v1130 = vpop.f32.mrf.mxu0
        %v1131 = vadd.f32 0.0, %v1130
        %v1132 = vpop.f32.mrf.mxu0
        %1133 = vmatprep.mubr.bf16.mxu0 0
        %1134 = vmatmul.mubr.bf16.gmra.mxu0 %v1038
        %v1135 = vpop.f32.mrf.mxu0
        %v1136 = vadd.f32 0.0, %v1135
        %v1137 = vpop.f32.mrf.mxu0
        %v1138 = vpop.f32.mrf.mxu0
        %v1139 = vadd.f32 0.0, %v1138
        %v1140 = vpop.f32.mrf.mxu0
        %1141 = vmatprep.mubr.bf16.mxu0 0
        %1142 = vmatmul.mubr.bf16.gmra.mxu0 %v1039
        %v1143 = vpop.f32.mrf.mxu0
        %v1144 = vadd.f32 0.0, %v1143
        %v1145 = vpop.f32.mrf.mxu0
        %v1146 = vpop.f32.mrf.mxu0
        %v1147 = vadd.f32 0.0, %v1146
        %v1148 = vpop.f32.mrf.mxu0
        %1149 = vmatprep.mubr.bf16.mxu0 0
        %1150 = vmatmul.mubr.bf16.gmra.mxu0 %v1040
        %v1151 = vpop.f32.mrf.mxu0
        %v1152 = vadd.f32 0.0, %v1151
        %v1153 = vpop.f32.mrf.mxu0
        %v1154 = vpop.f32.mrf.mxu0
        %v1155 = vadd.f32 0.0, %v1154
        %v1156 = vpop.f32.mrf.mxu0
        %1157 = vmatprep.mubr.bf16.mxu0 0
        %1158 = vmatmul.mubr.bf16.gmra.mxu0 %v1041
        %v1159 = vpop.f32.mrf.mxu0
        %v1160 = vadd.f32 0.0, %v1159
        %v1161 = vpop.f32.mrf.mxu0
        %v1162 = vpop.f32.mrf.mxu0
        %v1163 = vadd.f32 0.0, %v1162
        %v1164 = vpop.f32.mrf.mxu0
        %1165 = vmatprep.mubr.bf16.mxu0 0
        %1166 = vmatmul.mubr.bf16.gmra.mxu0 %v1042
        %v1167 = vpop.f32.mrf.mxu0
        %v1168 = vadd.f32 0.0, %v1167
        %v1169 = vpop.f32.mrf.mxu0
        %v1170 = vpop.f32.mrf.mxu0
        %v1171 = vadd.f32 0.0, %v1170
        %v1172 = vpop.f32.mrf.mxu0
        %1173 = vmatprep.mubr.bf16.mxu0 0
        %1174 = vmatmul.mubr.bf16.gmra.mxu0 %v1043
        %v1175 = vpop.f32.mrf.mxu0
        %v1176 = vadd.f32 0.0, %v1175
        %v1177 = vpop.f32.mrf.mxu0
        %v1178 = vpop.f32.mrf.mxu0
        %v1179 = vadd.f32 0.0, %v1178
        %v1180 = vpop.f32.mrf.mxu0
        %1181 = vmatprep.mubr.bf16.mxu0 0
        %1182 = vmatmul.mubr.bf16.gmra.mxu0 %v1044
        %v1183 = vpop.f32.mrf.mxu0
        %v1184 = vadd.f32 0.0, %v1183
        %v1185 = vpop.f32.mrf.mxu0
        %v1186 = vpop.f32.mrf.mxu0
        %v1187 = vadd.f32 0.0, %v1186
        %v1188 = vpop.f32.mrf.mxu0
        %1189 = vdwg.mxu0
        %v1190 = vpack.c.bf16 %v1131, %v1128
        %v1191 = vpack.c.bf16 %v1139, %v1136
        %v1192 = vpack.c.bf16 %v1147, %v1144
        %v1193 = vpack.c.bf16 %v1155, %v1152
        %v1194 = vpack.c.bf16 %v1163, %v1160
        %v1195 = vpack.c.bf16 %v1171, %v1168
        %v1196 = vpack.c.bf16 %v1179, %v1176
        %v1197 = vpack.c.bf16 %v1187, %v1184
        %v1198 = vld [vmem:[%s5] sm:$0xf]
        %v1199 = vld [vmem:[%s5 + $0x4] sm:$0xf]
        %v1200 = vld [vmem:[%s5 + $0x8] sm:$0xf]
        %v1201 = vld [vmem:[%s5 + $0xc] sm:$0xf]
        %v1202 = vld [vmem:[%s6] sm:$0xf]
        %v1219 = vunpack.c.l.b16 %v516
        %v1220 = vunpack.c.l.b16 %v517
        %v1221 = vunpack.c.l.b16 %v518
        %v1222 = vunpack.c.l.b16 %v519
        %v1223 = vunpack.c.l.b16 %v520
        %v1224 = vunpack.c.l.b16 %v521
        %v1225 = vunpack.c.l.b16 %v522
        %v1226 = vunpack.c.l.b16 %v523
        %v1227 = vunpack.c.l.b16 %v524
        %v1228 = vunpack.c.l.b16 %v525
        %v1229 = vunpack.c.l.b16 %v526
        %v1230 = vunpack.c.l.b16 %v527
        %v1231 = vunpack.c.l.b16 %v528
        %v1232 = vunpack.c.l.b16 %v529
        %v1233 = vunpack.c.l.b16 %v530
        %v1234 = vunpack.c.l.b16 %v531
        %v1235 = vpack.c.b16 %v1220, %v1219
        %v1236 = vpack.c.b16 %v1222, %v1221
        %v1237 = vpack.c.b16 %v1224, %v1223
        %v1238 = vpack.c.b16 %v1226, %v1225
        %v1239 = vpack.c.b16 %v1228, %v1227
        %v1240 = vpack.c.b16 %v1230, %v1229
        %v1241 = vpack.c.b16 %v1232, %v1231
        %v1242 = vpack.c.b16 %v1234, %v1233
        %vm1243 = vcmask 64512
        %v1245 = vsel %vm1243, %v1235, 0
        %v1248 = vsel %vm1243, %v1236, 0
        %v1251 = vsel %vm1243, %v1237, 0
        %v1254 = vsel %vm1243, %v1238, 0
        %v1257 = vsel %vm1243, %v1239, 0
        %v1260 = vsel %vm1243, %v1240, 0
        %v1263 = vsel %vm1243, %v1241, 0
        %v1266 = vsel %vm1243, %v1242, 0
        %vm1268 = vcmask 1043456
        %v1270 = vsel %vm1268, %v1202, 0
        %1272 = vmatprep.subr.bf16.mxu0 0
        %1273 = vmatpush1.bf16.msra.mxu0 0
        %1274 = vmatprep.subr.bf16.mxu0 0
        %1275 = vmatpush1.bf16.msra.mxu0 0
        %1276 = vmatprep.subr.bf16.mxu0 0
        %1277 = vmatpush1.bf16.msra.mxu0 0
        %1278 = vmatprep.subr.bf16.mxu0 0
        %1279 = vmatpush1.bf16.msra.mxu0 0
        %1280 = vmatprep.subr.bf16.mxu0 0
        %1281 = vmatpush1.bf16.msra.mxu0 0
        %1282 = vmatprep.subr.bf16.mxu0 0
        %1283 = vmatpush1.bf16.msra.mxu0 0
        %1284 = vmatprep.subr.bf16.mxu0 0
        %1285 = vmatpush1.bf16.msra.mxu0 0
        %1286 = vmatprep.subr.bf16.mxu0 0
        %1287 = vmatpush1.bf16.msra.mxu0 %v1270
        %1288 = vmatprep.subr.bf16.mxu0 0
        %1289 = vmatpush2.bf16.msra.mxu0 0
        %1290 = vmatprep.subr.bf16.mxu0 0
        %1291 = vmatpush2.bf16.msra.mxu0 0
        %1292 = vmatprep.subr.bf16.mxu0 0
        %1293 = vmatpush2.bf16.msra.mxu0 0
        %1294 = vmatprep.subr.bf16.mxu0 0
        %1295 = vmatpush2.bf16.msra.mxu0 0
        %1296 = vmatprep.subr.bf16.mxu0 0
        %1297 = vmatpush2.bf16.msra.mxu0 0
        %1298 = vmatprep.subr.bf16.mxu0 0
        %1299 = vmatpush2.bf16.msra.mxu0 0
        %1300 = vmatprep.subr.bf16.mxu0 0
        %1301 = vmatpush2.bf16.msra.mxu0 0
        %1302 = vmatprep.subr.bf16.mxu0 0
        %1303 = vmatpush2.bf16.msra.mxu0 0
        %1304 = vmatprep.mubr.bf16.mxu0 0
        %1305 = vmatmul.mubr.bf16.gmra.mxu0 %v1245
        %v1306 = vpop.f32.mrf.mxu0
        %v1307 = vadd.f32 0.0, %v1306
        %v1308 = vpop.f32.mrf.mxu0
        %v1309 = vpop.f32.mrf.mxu0
        %v1310 = vadd.f32 0.0, %v1309
        %v1311 = vpop.f32.mrf.mxu0
        %1312 = vmatprep.mubr.bf16.mxu0 0
        %1313 = vmatmul.mubr.bf16.gmra.mxu0 %v1248
        %v1314 = vpop.f32.mrf.mxu0
        %v1315 = vadd.f32 0.0, %v1314
        %v1316 = vpop.f32.mrf.mxu0
        %v1317 = vpop.f32.mrf.mxu0
        %v1318 = vadd.f32 0.0, %v1317
        %v1319 = vpop.f32.mrf.mxu0
        %1320 = vmatprep.mubr.bf16.mxu0 0
        %1321 = vmatmul.mubr.bf16.gmra.mxu0 %v1251
        %v1322 = vpop.f32.mrf.mxu0
        %v1323 = vadd.f32 0.0, %v1322
        %v1324 = vpop.f32.mrf.mxu0
        %v1325 = vpop.f32.mrf.mxu0
        %v1326 = vadd.f32 0.0, %v1325
        %v1327 = vpop.f32.mrf.mxu0
        %1328 = vmatprep.mubr.bf16.mxu0 0
        %1329 = vmatmul.mubr.bf16.gmra.mxu0 %v1254
        %v1330 = vpop.f32.mrf.mxu0
        %v1331 = vadd.f32 0.0, %v1330
        %v1332 = vpop.f32.mrf.mxu0
        %v1333 = vpop.f32.mrf.mxu0
        %v1334 = vadd.f32 0.0, %v1333
        %v1335 = vpop.f32.mrf.mxu0
        %1336 = vmatprep.mubr.bf16.mxu0 0
        %1337 = vmatmul.mubr.bf16.gmra.mxu0 %v1257
        %v1338 = vpop.f32.mrf.mxu0
        %v1339 = vadd.f32 0.0, %v1338
        %v1340 = vpop.f32.mrf.mxu0
        %v1341 = vpop.f32.mrf.mxu0
        %v1342 = vadd.f32 0.0, %v1341
        %v1343 = vpop.f32.mrf.mxu0
        %1344 = vmatprep.mubr.bf16.mxu0 0
        %1345 = vmatmul.mubr.bf16.gmra.mxu0 %v1260
        %v1346 = vpop.f32.mrf.mxu0
        %v1347 = vadd.f32 0.0, %v1346
        %v1348 = vpop.f32.mrf.mxu0
        %v1349 = vpop.f32.mrf.mxu0
        %v1350 = vadd.f32 0.0, %v1349
        %v1351 = vpop.f32.mrf.mxu0
        %1352 = vmatprep.mubr.bf16.mxu0 0
        %1353 = vmatmul.mubr.bf16.gmra.mxu0 %v1263
        %v1354 = vpop.f32.mrf.mxu0
        %v1355 = vadd.f32 0.0, %v1354
        %v1356 = vpop.f32.mrf.mxu0
        %v1357 = vpop.f32.mrf.mxu0
        %v1358 = vadd.f32 0.0, %v1357
        %v1359 = vpop.f32.mrf.mxu0
        %1360 = vmatprep.mubr.bf16.mxu0 0
        %1361 = vmatmul.mubr.bf16.gmra.mxu0 %v1266
        %v1362 = vpop.f32.mrf.mxu0
        %v1363 = vadd.f32 0.0, %v1362
        %v1364 = vpop.f32.mrf.mxu0
        %v1365 = vpop.f32.mrf.mxu0
        %v1366 = vadd.f32 0.0, %v1365
        %v1367 = vpop.f32.mrf.mxu0
        %1368 = vdwg.mxu0
        %v1373 = vunpack.c.l.b16 %v1198
        %v1374 = vunpack.c.l.b16 %v1199
        %v1375 = vunpack.c.l.b16 %v1200
        %v1376 = vunpack.c.l.b16 %v1201
        %v1377 = vpack.c.b16 %v1374, %v1373
        %v1378 = vpack.c.b16 %v1376, %v1375
        %v1382 = vsel %vm612, %v1190, 0
        %v1385 = vsel %vm612, %v1191, 0
        %v1388 = vsel %vm612, %v1192, 0
        %v1391 = vsel %vm612, %v1193, 0
        %v1394 = vsel %vm612, %v1194, 0
        %v1397 = vsel %vm612, %v1195, 0
        %v1400 = vsel %vm612, %v1196, 0
        %v1403 = vsel %vm612, %v1197, 0
        %1405 = vmatprep.subr.bf16.mxu0 0
        %1406 = vmatpush1.bf16.msra.mxu0 0
        %1407 = vmatprep.subr.bf16.mxu0 0
        %1408 = vmatpush1.bf16.msra.mxu0 0
        %1409 = vmatprep.subr.bf16.mxu0 0
        %1410 = vmatpush1.bf16.msra.mxu0 0
        %1411 = vmatprep.subr.bf16.mxu0 0
        %1412 = vmatpush1.bf16.msra.mxu0 0
        %1413 = vmatprep.subr.bf16.mxu0 0
        %1414 = vmatpush1.bf16.msra.mxu0 0
        %1415 = vmatprep.subr.bf16.mxu0 0
        %1416 = vmatpush1.bf16.msra.mxu0 0
        %1417 = vmatprep.subr.bf16.mxu0 0
        %1418 = vmatpush1.bf16.msra.mxu0 %v1378
        %1419 = vmatprep.subr.bf16.mxu0 0
        %1420 = vmatpush1.bf16.msra.mxu0 %v1377
        %1421 = vmatprep.subr.bf16.mxu0 0
        %1422 = vmatpush2.bf16.msra.mxu0 0
        %1423 = vmatprep.subr.bf16.mxu0 0
        %1424 = vmatpush2.bf16.msra.mxu0 0
        %1425 = vmatprep.subr.bf16.mxu0 0
        %1426 = vmatpush2.bf16.msra.mxu0 0
        %1427 = vmatprep.subr.bf16.mxu0 0
        %1428 = vmatpush2.bf16.msra.mxu0 0
        %1429 = vmatprep.subr.bf16.mxu0 0
        %1430 = vmatpush2.bf16.msra.mxu0 0
        %1431 = vmatprep.subr.bf16.mxu0 0
        %1432 = vmatpush2.bf16.msra.mxu0 0
        %1433 = vmatprep.subr.bf16.mxu0 0
        %1434 = vmatpush2.bf16.msra.mxu0 0
        %1435 = vmatprep.subr.bf16.mxu0 0
        %1436 = vmatpush2.bf16.msra.mxu0 0
        %1437 = vmatprep.mubr.bf16.mxu0 0
        %1438 = vmatmul.mubr.bf16.gmra.mxu0 %v1382
        %v1439 = vpop.f32.mrf.mxu0
        %v1440 = vadd.f32 %v1307, %v1439
        %v1441 = vpop.f32.mrf.mxu0
        %v1442 = vpop.f32.mrf.mxu0
        %v1443 = vadd.f32 %v1310, %v1442
        %v1444 = vpop.f32.mrf.mxu0
        %1445 = vmatprep.mubr.bf16.mxu0 0
        %1446 = vmatmul.mubr.bf16.gmra.mxu0 %v1385
        %v1447 = vpop.f32.mrf.mxu0
        %v1448 = vadd.f32 %v1315, %v1447
        %v1449 = vpop.f32.mrf.mxu0
        %v1450 = vpop.f32.mrf.mxu0
        %v1451 = vadd.f32 %v1318, %v1450
        %v1452 = vpop.f32.mrf.mxu0
        %1453 = vmatprep.mubr.bf16.mxu0 0
        %1454 = vmatmul.mubr.bf16.gmra.mxu0 %v1388
        %v1455 = vpop.f32.mrf.mxu0
        %v1456 = vadd.f32 %v1323, %v1455
        %v1457 = vpop.f32.mrf.mxu0
        %v1458 = vpop.f32.mrf.mxu0
        %v1459 = vadd.f32 %v1326, %v1458
        %v1460 = vpop.f32.mrf.mxu0
        %1461 = vmatprep.mubr.bf16.mxu0 0
        %1462 = vmatmul.mubr.bf16.gmra.mxu0 %v1391
        %v1463 = vpop.f32.mrf.mxu0
        %v1464 = vadd.f32 %v1331, %v1463
        %v1465 = vpop.f32.mrf.mxu0
        %v1466 = vpop.f32.mrf.mxu0
        %v1467 = vadd.f32 %v1334, %v1466
        %v1468 = vpop.f32.mrf.mxu0
        %1469 = vmatprep.mubr.bf16.mxu0 0
        %1470 = vmatmul.mubr.bf16.gmra.mxu0 %v1394
        %v1471 = vpop.f32.mrf.mxu0
        %v1472 = vadd.f32 %v1339, %v1471
        %v1473 = vpop.f32.mrf.mxu0
        %v1474 = vpop.f32.mrf.mxu0
        %v1475 = vadd.f32 %v1342, %v1474
        %v1476 = vpop.f32.mrf.mxu0
        %1477 = vmatprep.mubr.bf16.mxu0 0
        %1478 = vmatmul.mubr.bf16.gmra.mxu0 %v1397
        %v1479 = vpop.f32.mrf.mxu0
        %v1480 = vadd.f32 %v1347, %v1479
        %v1481 = vpop.f32.mrf.mxu0
        %v1482 = vpop.f32.mrf.mxu0
        %v1483 = vadd.f32 %v1350, %v1482
        %v1484 = vpop.f32.mrf.mxu0
        %1485 = vmatprep.mubr.bf16.mxu0 0
        %1486 = vmatmul.mubr.bf16.gmra.mxu0 %v1400
        %v1487 = vpop.f32.mrf.mxu0
        %v1488 = vadd.f32 %v1355, %v1487
        %v1489 = vpop.f32.mrf.mxu0
        %v1490 = vpop.f32.mrf.mxu0
        %v1491 = vadd.f32 %v1358, %v1490
        %v1492 = vpop.f32.mrf.mxu0
        %1493 = vmatprep.mubr.bf16.mxu0 0
        %1494 = vmatmul.mubr.bf16.gmra.mxu0 %v1403
        %v1495 = vpop.f32.mrf.mxu0
        %v1496 = vadd.f32 %v1363, %v1495
        %v1497 = vpop.f32.mrf.mxu0
        %v1498 = vpop.f32.mrf.mxu0
        %v1499 = vadd.f32 %v1366, %v1498
        %v1500 = vpop.f32.mrf.mxu0
        %1501 = vdwg.mxu0
        %v1502 = vld [vmem:[%s7] sm:$0x1]
        %v1504 = vlaneseq
        %v1505 = vshrl.u32 %v1504, 7
        %v1506 = vsub.s32 0, %v1505
        %v1507 = vrot.slane %v1502, %v1506
        %v1509 = vadd.f32 %v1440, %v1507
        %v1510 = vadd.f32 %v1443, %v1507
        %v1511 = vadd.f32 %v1448, %v1507
        %v1512 = vadd.f32 %v1451, %v1507
        %v1513 = vadd.f32 %v1456, %v1507
        %v1514 = vadd.f32 %v1459, %v1507
        %v1515 = vadd.f32 %v1464, %v1507
        %v1516 = vadd.f32 %v1467, %v1507
        %v1517 = vadd.f32 %v1472, %v1507
        %v1518 = vadd.f32 %v1475, %v1507
        %v1519 = vadd.f32 %v1480, %v1507
        %v1520 = vadd.f32 %v1483, %v1507
        %v1521 = vadd.f32 %v1488, %v1507
        %v1522 = vadd.f32 %v1491, %v1507
        %v1523 = vadd.f32 %v1496, %v1507
        %v1524 = vadd.f32 %v1499, %v1507
        %v1525 = vpack.c.bf16 %v1510, %v1509
        %v1526 = vpack.c.bf16 %v1512, %v1511
        %v1527 = vpack.c.bf16 %v1514, %v1513
        %v1528 = vpack.c.bf16 %v1516, %v1515
        %v1529 = vpack.c.bf16 %v1518, %v1517
        %v1530 = vpack.c.bf16 %v1520, %v1519
        %v1531 = vpack.c.bf16 %v1522, %v1521
        %v1532 = vpack.c.bf16 %v1524, %v1523
        %v1533 = vld [vmem:[%s8] sm:$0xf]
        %v1534 = vld [vmem:[%s8 + $0x4] sm:$0xf]
        %v1535 = vld [vmem:[%s8 + $0x8] sm:$0xf]
        %v1536 = vld [vmem:[%s8 + $0xc] sm:$0xf]
        %v1537 = vld [vmem:[%s9] sm:$0x1]
        %v1539 = vlaneseq
        %v1540 = vshrl.u32 %v1539, 7
        %v1541 = vsub.s32 0, %v1540
        %v1542 = vrot.slane %v1537, %v1541
        %v1548 = vunpack.c.l.b16 %v1533
        %v1549 = vunpack.c.l.b16 %v1534
        %v1550 = vunpack.c.l.b16 %v1535
        %v1551 = vunpack.c.l.b16 %v1536
        %v1552 = vpack.c.b16 %v1549, %v1548
        %v1553 = vpack.c.b16 %v1551, %v1550
        %v1557 = vsel %vm612, %v1525, 0
        %v1560 = vsel %vm612, %v1526, 0
        %v1563 = vsel %vm612, %v1527, 0
        %v1566 = vsel %vm612, %v1528, 0
        %v1569 = vsel %vm612, %v1529, 0
        %v1572 = vsel %vm612, %v1530, 0
        %v1575 = vsel %vm612, %v1531, 0
        %v1578 = vsel %vm612, %v1532, 0
        %1580 = vmatprep.subr.bf16.mxu0 0
        %1581 = vmatpush1.bf16.msra.mxu0 0
        %1582 = vmatprep.subr.bf16.mxu0 0
        %1583 = vmatpush1.bf16.msra.mxu0 0
        %1584 = vmatprep.subr.bf16.mxu0 0
        %1585 = vmatpush1.bf16.msra.mxu0 0
        %1586 = vmatprep.subr.bf16.mxu0 0
        %1587 = vmatpush1.bf16.msra.mxu0 0
        %1588 = vmatprep.subr.bf16.mxu0 0
        %1589 = vmatpush1.bf16.msra.mxu0 0
        %1590 = vmatprep.subr.bf16.mxu0 0
        %1591 = vmatpush1.bf16.msra.mxu0 0
        %1592 = vmatprep.subr.bf16.mxu0 0
        %1593 = vmatpush1.bf16.msra.mxu0 %v1553
        %1594 = vmatprep.subr.bf16.mxu0 0
        %1595 = vmatpush1.bf16.msra.mxu0 %v1552
        %1596 = vmatprep.subr.bf16.mxu0 0
        %1597 = vmatpush2.bf16.msra.mxu0 0
        %1598 = vmatprep.subr.bf16.mxu0 0
        %1599 = vmatpush2.bf16.msra.mxu0 0
        %1600 = vmatprep.subr.bf16.mxu0 0
        %1601 = vmatpush2.bf16.msra.mxu0 0
        %1602 = vmatprep.subr.bf16.mxu0 0
        %1603 = vmatpush2.bf16.msra.mxu0 0
        %1604 = vmatprep.subr.bf16.mxu0 0
        %1605 = vmatpush2.bf16.msra.mxu0 0
        %1606 = vmatprep.subr.bf16.mxu0 0
        %1607 = vmatpush2.bf16.msra.mxu0 0
        %1608 = vmatprep.subr.bf16.mxu0 0
        %1609 = vmatpush2.bf16.msra.mxu0 0
        %1610 = vmatprep.subr.bf16.mxu0 0
        %1611 = vmatpush2.bf16.msra.mxu0 0
        %1612 = vmatprep.mubr.bf16.mxu0 0
        %1613 = vmatmul.mubr.bf16.gmra.mxu0 %v1557
        %v1614 = vpop.f32.mrf.mxu0
        %v1615 = vadd.f32 %v1542, %v1614
        %v1616 = vpop.f32.mrf.mxu0
        %v1617 = vpop.f32.mrf.mxu0
        %v1618 = vadd.f32 %v1542, %v1617
        %v1619 = vpop.f32.mrf.mxu0
        %1620 = vmatprep.mubr.bf16.mxu0 0
        %1621 = vmatmul.mubr.bf16.gmra.mxu0 %v1560
        %v1622 = vpop.f32.mrf.mxu0
        %v1623 = vadd.f32 %v1542, %v1622
        %v1624 = vpop.f32.mrf.mxu0
        %v1625 = vpop.f32.mrf.mxu0
        %v1626 = vadd.f32 %v1542, %v1625
        %v1627 = vpop.f32.mrf.mxu0
        %1628 = vmatprep.mubr.bf16.mxu0 0
        %1629 = vmatmul.mubr.bf16.gmra.mxu0 %v1563
        %v1630 = vpop.f32.mrf.mxu0
        %v1631 = vadd.f32 %v1542, %v1630
        %v1632 = vpop.f32.mrf.mxu0
        %v1633 = vpop.f32.mrf.mxu0
        %v1634 = vadd.f32 %v1542, %v1633
        %v1635 = vpop.f32.mrf.mxu0
        %1636 = vmatprep.mubr.bf16.mxu0 0
        %1637 = vmatmul.mubr.bf16.gmra.mxu0 %v1566
        %v1638 = vpop.f32.mrf.mxu0
        %v1639 = vadd.f32 %v1542, %v1638
        %v1640 = vpop.f32.mrf.mxu0
        %v1641 = vpop.f32.mrf.mxu0
        %v1642 = vadd.f32 %v1542, %v1641
        %v1643 = vpop.f32.mrf.mxu0
        %1644 = vmatprep.mubr.bf16.mxu0 0
        %1645 = vmatmul.mubr.bf16.gmra.mxu0 %v1569
        %v1646 = vpop.f32.mrf.mxu0
        %v1647 = vadd.f32 %v1542, %v1646
        %v1648 = vpop.f32.mrf.mxu0
        %v1649 = vpop.f32.mrf.mxu0
        %v1650 = vadd.f32 %v1542, %v1649
        %v1651 = vpop.f32.mrf.mxu0
        %1652 = vmatprep.mubr.bf16.mxu0 0
        %1653 = vmatmul.mubr.bf16.gmra.mxu0 %v1572
        %v1654 = vpop.f32.mrf.mxu0
        %v1655 = vadd.f32 %v1542, %v1654
        %v1656 = vpop.f32.mrf.mxu0
        %v1657 = vpop.f32.mrf.mxu0
        %v1658 = vadd.f32 %v1542, %v1657
        %v1659 = vpop.f32.mrf.mxu0
        %1660 = vmatprep.mubr.bf16.mxu0 0
        %1661 = vmatmul.mubr.bf16.gmra.mxu0 %v1575
        %v1662 = vpop.f32.mrf.mxu0
        %v1663 = vadd.f32 %v1542, %v1662
        %v1664 = vpop.f32.mrf.mxu0
        %v1665 = vpop.f32.mrf.mxu0
        %v1666 = vadd.f32 %v1542, %v1665
        %v1667 = vpop.f32.mrf.mxu0
        %1668 = vmatprep.mubr.bf16.mxu0 0
        %1669 = vmatmul.mubr.bf16.gmra.mxu0 %v1578
        %v1670 = vpop.f32.mrf.mxu0
        %v1671 = vadd.f32 %v1542, %v1670
        %v1672 = vpop.f32.mrf.mxu0
        %v1673 = vpop.f32.mrf.mxu0
        %v1674 = vadd.f32 %v1542, %v1673
        %v1675 = vpop.f32.mrf.mxu0
        %1676 = vdwg.mxu0
        %v1677 = vmax.f32 %v1615, 0.0
        %v1678 = vmax.f32 %v1618, 0.0
        %v1679 = vmax.f32 %v1623, 0.0
        %v1680 = vmax.f32 %v1626, 0.0
        %v1681 = vmax.f32 %v1631, 0.0
        %v1682 = vmax.f32 %v1634, 0.0
        %v1683 = vmax.f32 %v1639, 0.0
        %v1684 = vmax.f32 %v1642, 0.0
        %v1685 = vmax.f32 %v1647, 0.0
        %v1686 = vmax.f32 %v1650, 0.0
        %v1687 = vmax.f32 %v1655, 0.0
        %v1688 = vmax.f32 %v1658, 0.0
        %v1689 = vmax.f32 %v1663, 0.0
        %v1690 = vmax.f32 %v1666, 0.0
        %v1691 = vmax.f32 %v1671, 0.0
        %v1692 = vmax.f32 %v1674, 0.0
        %v1693 = vld [vmem:[%s10] sm:$0x1]
        %v1694 = vpack.c.bf16 %v1678, %v1677
        %v1695 = vpack.c.bf16 %v1680, %v1679
        %v1696 = vpack.c.bf16 %v1682, %v1681
        %v1697 = vpack.c.bf16 %v1684, %v1683
        %v1698 = vpack.c.bf16 %v1686, %v1685
        %v1699 = vpack.c.bf16 %v1688, %v1687
        %v1700 = vpack.c.bf16 %v1690, %v1689
        %v1701 = vpack.c.bf16 %v1692, %v1691
        %v1702 = vld [vmem:[#allocation2] sm:$0x1]
        %1704 = vset.pattern.permute.xlu0 0
        %1705 = vperm.xlu0 %1704, %v1702
        %v1706 = vpop.permute.xlu0 %1705
        %v1708 = vlaneseq
        %v1709 = vshrl.u32 %v1708, 7
        %v1710 = vsub.s32 0, %v1709
        %v1711 = vrot.slane %v1706, %v1710
        %vm1712 = vcmask 523264
        %v1714 = vsel %vm1712, %v1693, 0
        %v1717 = vsel %vm1712, %v1694, 0
        %v1720 = vsel %vm1712, %v1695, 0
        %v1723 = vsel %vm1712, %v1696, 0
        %v1726 = vsel %vm1712, %v1697, 0
        %v1729 = vsel %vm1712, %v1698, 0
        %v1732 = vsel %vm1712, %v1699, 0
        %v1735 = vsel %vm1712, %v1700, 0
        %v1738 = vsel %vm1712, %v1701, 0
        %1740 = vmatprep.subr.bf16.mxu0 0
        %1741 = vmatpush1.bf16.xpose.msra.mxu0 %v1738
        %1742 = vmatprep.subr.bf16.mxu0 0
        %1743 = vmatpush1.bf16.xpose.msra.mxu0 %v1735
        %1744 = vmatprep.subr.bf16.mxu0 0
        %1745 = vmatpush1.bf16.xpose.msra.mxu0 %v1732
        %1746 = vmatprep.subr.bf16.mxu0 0
        %1747 = vmatpush1.bf16.xpose.msra.mxu0 %v1729
        %1748 = vmatprep.subr.bf16.mxu0 0
        %1749 = vmatpush1.bf16.xpose.msra.mxu0 %v1726
        %1750 = vmatprep.subr.bf16.mxu0 0
        %1751 = vmatpush1.bf16.xpose.msra.mxu0 %v1723
        %1752 = vmatprep.subr.bf16.mxu0 0
        %1753 = vmatpush1.bf16.xpose.msra.mxu0 %v1720
        %1754 = vmatprep.subr.bf16.mxu0 0
        %1755 = vmatpush1.bf16.xpose.msra.mxu0 %v1717
        %1756 = vmatprep.subr.bf16.mxu0 0
        %1757 = vmatpush2.bf16.xpose.msra.mxu0 0
        %1758 = vmatprep.subr.bf16.mxu0 0
        %1759 = vmatpush2.bf16.xpose.msra.mxu0 0
        %1760 = vmatprep.subr.bf16.mxu0 0
        %1761 = vmatpush2.bf16.xpose.msra.mxu0 0
        %1762 = vmatprep.subr.bf16.mxu0 0
        %1763 = vmatpush2.bf16.xpose.msra.mxu0 0
        %1764 = vmatprep.subr.bf16.mxu0 0
        %1765 = vmatpush2.bf16.xpose.msra.mxu0 0
        %1766 = vmatprep.subr.bf16.mxu0 0
        %1767 = vmatpush2.bf16.xpose.msra.mxu0 0
        %1768 = vmatprep.subr.bf16.mxu0 0
        %1769 = vmatpush2.bf16.xpose.msra.mxu0 0
        %1770 = vmatprep.subr.bf16.mxu0 0
        %1771 = vmatpush2.bf16.xpose.msra.mxu0 0
        %1772 = vmatprep.mubr.bf16.mxu0 0
        %1773 = vmatmul.mubr.bf16.gmra.mxu0 %v1714
        %v1774 = vpop.f32.mrf.mxu0
        %v1775 = vadd.f32 %v1711, %v1774
        %v1776 = vpop.f32.mrf.mxu0
        %v1777 = vpop.f32.mrf.mxu0
        %v1778 = vpop.f32.mrf.mxu0
        %1779 = vdwg.mxu0
        %1780 = vst [vmem:[%s448] sm:$0x1] %v1775
        %s1781 = sand.u32 %s308, 1
        %s1782 = scalar_lea.sflag [#allocation4], %s1781
        %s1783 = sand.u32 %s308, 1
        %s1784 = scalar_lea.vmem [#allocation3], %s1783
        // Predicated region
        $region69: #{tpu_custom_call.1} parent=67 // pred_check
          %p1785 = pneg %p318
        $region70: #{tpu_custom_call.1} parent=67 // pred_check_branch
          %1787 = sbr.rel (%p1785) target = $region72
        $region71: #{tpu_custom_call.1} parent=67 // pred_region
          %s1789 = ssub.s32 16, 16
          %1790 = vsyncadd %s1782, %s1789
          %s1791 = smul.addr %s28, 16
          %s1792 = scalar_lea.hbm %s12, %s1791
          %s1794 = sshll.u32 %s1784, 4
          %s1795 = int_to_ptr.vmem [resolvable:$true] %s1794
          %1797 = dma.vmem_to_hbm [thread:$0]  %s1795, 16, %s1792, %s1782
        $region72: #{tpu_custom_call.1} parent=67 // pred_fallthru
          _
      $region68: #{tpu_custom_call.1} parent=5 // pred_fallthru
        _
      %p1798 = scmp.le.s32.totalorder 2, %s23
      // Predicated region
      $region73: #{tpu_custom_call.1} parent=5 // pred_check
        %p1799 = pneg %p1798
      $region74: #{tpu_custom_call.1} parent=5 // pred_check_branch
        %1801 = sbr.rel (%p1799) target = $region76
      $region75: #{tpu_custom_call.1} parent=5 // pred_region
        %s1802 = ssub.s32 %s23, 2
        // Predicated region
        $region77: #{tpu_custom_call.1} parent=75 // pred_check
          %p1803 = pneg %p324
        $region78: #{tpu_custom_call.1} parent=75 // pred_check_branch
          %1805 = sbr.rel (%p1803) target = $region80
        $region79: #{tpu_custom_call.1} parent=75 // pred_region
          %s1806 = sand.u32 %s309, 1
          %s1807 = scalar_lea.sflag [#allocation4], %s1806
          %s1808 = sand.u32 %s309, 1
          %s1809 = scalar_lea.vmem [#allocation3], %s1808
          %1810 = dma.done %s1807, 16
        $region80: #{tpu_custom_call.1} parent=75 // pred_fallthru
          _
      $region76: #{tpu_custom_call.1} parent=5 // pred_fallthru
        _
    $region6: #{tpu_custom_call.1} parent=1 // loop_footer
      %s27 = sadd.s32 1, %s23
    $region7: #{tpu_custom_call.1} parent=1 // loop_footer_branch
      %22 = sbr.rel target = $region3
    $region8: #{tpu_custom_call.1} parent=1 // loop_exit
      _
    %1811 = vsyncpa [#allocation4], 1
    %s1812 = scalar_lea.sflag [#allocation4], 1
    %1813 = vsyncpa %s1812, 1

</llo_original>
